<compile_context>
chip_gen: v6e
topology: v6e:2x2x1
jax: 0.10.0
libtpu: 0.0.40
codegen_flags: <defaults>
</compile_context>

<pallas_src>
import jax
import jax.numpy as jnp
from jax.experimental import pallas as pl
from jax.experimental.pallas import tpu as pltpu


def _round_up(v, m):
    return ((v + m - 1) // m) * m


def _make_fused_kernel(N, H, W, Cout, Cpad, halo):
    """Builds the fused [conv3x3 + BN + ReLU] x 2 kernel for fixed geometry."""
    L = N * H * W
    inv_L = 1.0 / L
    # Static tap shifts along the flat spatial axis, kh-major / kw-minor --
    # must match the column order produced by _pack_conv_weight.
    shifts = [(kh - 1) * W + (kw - 1) for kh in range(3) for kw in range(3)]
    center_tap = 4                       # (dh, dw) == (0, 0): mask is all ones

    def kernel(x_ref, mask_ref, w1_ref, g1_ref, b1_ref, w2_ref, g2_ref, b2_ref,
               out_ref, xflat_ref, patch_ref):
        # Zero ONLY the halo columns once. The valid region [halo, halo+L) is
        # fully overwritten by each conv's staging store; the halos are never
        # written and uninitialized VMEM could be NaN (which a mask-multiply
        # would not neutralize), so they must be finite zeros.
        xflat_ref[:, 0:halo] = jnp.zeros((Cpad, halo), jnp.float32)
        xflat_ref[:, halo + L:halo + 2 * L // L * halo + L] = \
            jnp.zeros((Cpad, halo), jnp.float32)

        def conv_bn_relu(src, w_ref, g_ref, b_ref):
            # src: (rows <= Cpad, L) activation, channels-first / flat spatial.
            # Stage into the halo-padded flat buffer (lane-aligned dense store).
            xflat_ref[0:src.shape[0], halo:halo + L] = src

            # im2col: 9 statically shifted taps. Halo validity comes from the
            # PRECOMPUTED (9, L) mask input (broadcast multiply over Cpad); the
            # patch is stored in bf16 so the MXU runs at bf16-native rate and
            # store traffic / scratch are halved. Per-tap slabs (Cpad rows,
            # Cpad % 16 == 0) are aligned to the bf16 (16, 128) tile.
            for t in range(9):
                s = shifts[t]
                tap = xflat_ref[:, halo + s:halo + s + L]
                if t != center_tap:
                    tap = tap * mask_ref[t:t + 1, :]
                patch_ref[t * Cpad:(t + 1) * Cpad, :] = tap.astype(jnp.bfloat16)

            # One MXU matmul (bf16 x bf16, f32 accumulate):
            # (Cout, 9*Cpad) x (9*Cpad, L) -> (Cout, L).
            acc = jnp.dot(w_ref[...], patch_ref[...],
                          preferred_element_type=jnp.float32)

            # BatchNorm2d training-mode forward folded into a single
            # scale/shift: one-pass sum & sum-of-squares (XLU lane reductions),
            # rsqrt on the EUP, then one fused multiply-add + ReLU pass.
            ssum = jnp.sum(acc, axis=1, keepdims=True)
            ssq = jnp.sum(acc * acc, axis=1, keepdims=True)
            mean = ssum * inv_L
            var = ssq * inv_L - mean * mean                   # biased variance
            scale = g_ref[...] * jax.lax.rsqrt(var + 1e-5)
            shift = b_ref[...] - mean * scale
            return jnp.maximum(acc * scale + shift, 0.0)       # ReLU

        h1 = conv_bn_relu(x_ref[...], w1_ref, g1_ref, b1_ref)     # (Cout, L)
        out_ref[...] = conv_bn_relu(h1, w2_ref, g2_ref, b2_ref)   # lane-dense

    return kernel


def _make_tap_masks(N, H, W):
    """(9, L) f32 halo-validity masks, hoisted out of the kernel.

    Row t = kh*3 + kw is 1.0 where output position (h, w) has a valid
    (h+kh-1, w+kw-1) source pixel, else 0.0. Shared by both conv layers.
    """
    L = N * H * W
    ll = jnp.arange(L, dtype=jnp.int32)
    hh = (ll % (H * W)) // W
    ww = ll % W
    rows = []
    for kh in range(3):
        for kw in range(3):
            dh, dw = kh - 1, kw - 1
            valid = ((hh + dh >= 0) & (hh + dh < H) &
                     (ww + dw >= 0) & (ww + dw < W))
            rows.append(valid.astype(jnp.float32))
    return jnp.stack(rows, axis=0)


def _pack_conv_weight(w_oihw, cpad):
    """(Cout, Cin, 3, 3) PyTorch-layout weight -> (Cout, 9*cpad) bf16 GEMM matrix.

    Column (kh*3 + kw)*cpad + ci  <->  weight[co, ci, kh, kw]  (matches the
    kernel's patch row layout); padded channels get zero weights.
    """
    cout, cin, kh, kw = w_oihw.shape
    wt = jnp.transpose(w_oihw, (0, 2, 3, 1))                  # (Cout,3,3,Cin)
    wt = jnp.pad(wt, ((0, 0), (0, 0), (0, 0), (0, cpad - cin)))
    return wt.reshape(cout, kh * kw * cpad).astype(jnp.bfloat16)


def unet_conv2_forward(x_nchw, params):
    """Forward pass of unetConv2 (is_batchnorm=True, n=2). NCHW in / NCHW out."""
    (w1, _b1, g1, be1), (w2, _b2, g2, be2) = params
    N, Cin, H, W = x_nchw.shape
    Cout = w1.shape[0]
    # Channel padding rounded to 16: keeps every bf16 patch slab aligned to the
    # (16, 128) packed tile (dense stores); a no-op at production channel counts.
    Cpad = _round_up(max(Cin, Cout), 16)
    L = N * H * W
    # Geometry-derived halo: >= W+1 and a multiple of 128 so the staging store
    # of the valid region is lane-aligned (correct for real UNet widths too).
    halo = _round_up(W + 1, 128)

    # Channels-first, flat-spatial, channel-padded input: (Cpad, N*H*W).
    xcf = jnp.transpose(x_nchw, (1, 0, 2, 3)).reshape(Cin, L)
    xcf = jnp.pad(xcf, ((0, Cpad - Cin), (0, 0)))

    mask9 = _make_tap_masks(N, H, W)                          # (9, L) f32

    w1m = _pack_conv_weight(w1, Cpad)                         # (Cout, 9*Cpad) bf16
    w2m = _pack_conv_weight(w2, Cpad)
    g1c, be1c = g1.reshape(Cout, 1), be1.reshape(Cout, 1)
    g2c, be2c = g2.reshape(Cout, 1), be2.reshape(Cout, 1)
    # NOTE: conv biases (_b1, _b2) are intentionally NOT passed to the kernel:
    # training-mode BatchNorm subtracts the per-channel batch mean, which
    # cancels a per-channel bias exactly. If is_batchnorm=False or eval-mode
    # (running-stats) BN were used, the bias would have to be reinstated.

    kernel = _make_fused_kernel(N, H, W, Cout, Cpad, halo)

    out_cf = pl.pallas_call(
        kernel,
        out_shape=jax.ShapeDtypeStruct((Cout, L), jnp.float32),
        grid=(1,),
        in_specs=[
            pl.BlockSpec((Cpad, L), lambda i: (0, 0)),          # x (channels-first flat)
            pl.BlockSpec((9, L), lambda i: (0, 0)),             # precomputed tap masks
            pl.BlockSpec((Cout, 9 * Cpad), lambda i: (0, 0)),   # conv1 weight (bf16)
            pl.BlockSpec((Cout, 1), lambda i: (0, 0)),          # gamma1
            pl.BlockSpec((Cout, 1), lambda i: (0, 0)),          # beta1
            pl.BlockSpec((Cout, 9 * Cpad), lambda i: (0, 0)),   # conv2 weight (bf16)
            pl.BlockSpec((Cout, 1), lambda i: (0, 0)),          # gamma2
            pl.BlockSpec((Cout, 1), lambda i: (0, 0)),          # beta2
        ],
        out_specs=pl.BlockSpec((Cout, L), lambda i: (0, 0)),
        scratch_shapes=[
            pltpu.VMEM((Cpad, L + 2 * halo), jnp.float32),      # halo-padded activation
            pltpu.VMEM((9 * Cpad, L), jnp.bfloat16),            # im2col patch (bf16)
        ],
        compiler_params=pltpu.CompilerParams(
            dimension_semantics=("arbitrary",)),
    )(xcf, mask9, w1m, g1c, be1c, w2m, g2c, be2c)

    # (Cout, N*H*W) -> NCHW; reshape is free (contiguous), transpose is the
    # small layout op the NCHW interface requires anyway.
    return jnp.transpose(out_cf.reshape(Cout, N, H, W), (1, 0, 2, 3))


def init_unet_conv2_params(key, in_size, out_size, n=2, ks=3):
    """Kaiming-style init; layout mirrors the PyTorch module
    (conv weight OIHW, conv bias, BN gamma, BN beta) per repetition."""
    params = []
    cin = in_size
    for _ in range(n):
        key, wk, bk, gk = jax.random.split(key, 4)
        fan_in = cin * ks * ks
        w = jax.random.normal(wk, (out_size, cin, ks, ks), jnp.float32) \
            * jnp.sqrt(2.0 / fan_in)
        # Nonzero bias on purpose: it demonstrates the exact BN cancellation.
        b = 0.1 * jax.random.normal(bk, (out_size,), jnp.float32)
        gamma = 1.0 + 0.02 * jax.random.normal(gk, (out_size,), jnp.float32)
        beta = jnp.zeros((out_size,), jnp.float32)
        params.append((w, b, gamma, beta))
        cin = out_size
    return params


def unet_conv2_reference(x_nchw, params):
    """Pure-JAX f32 reference: Conv2d(3x3,s1,p1)+bias -> BN(train) -> ReLU, x n."""
    out = x_nchw
    for (w, b, gamma, beta) in params:
        out = jax.lax.conv_general_dilated(
            out, w, window_strides=(1, 1), padding=((1, 1), (1, 1)),
            dimension_numbers=("NCHW", "OIHW", "NCHW"))
        out = out + b.reshape(1, -1, 1, 1)
        mean = jnp.mean(out, axis=(0, 2, 3), keepdims=True)
        var = jnp.mean(jnp.square(out - mean), axis=(0, 2, 3), keepdims=True)
        out = (out - mean) * jax.lax.rsqrt(var + 1e-5)
        out = out * gamma.reshape(1, -1, 1, 1) + beta.reshape(1, -1, 1, 1)
        out = jnp.maximum(out, 0.0)
    return out


if __name__ == "__main__":
    # Small shapes consistent with the module: batch=2, in=4, out=8, 16x16.
    N, Cin, Cout, H, W = 2, 4, 8, 16, 16

    key = jax.random.PRNGKey(0)
    key, xk = jax.random.split(key)
    x = jax.random.normal(xk, (N, Cin, H, W), jnp.float32)
    params = init_unet_conv2_params(key, Cin, Cout, n=2)

    fwd = jax.jit(unet_conv2_forward)
    out = jax.block_until_ready(fwd(x, params))

    assert out.shape == (N, Cout, H, W), out.shape
    assert out.dtype == jnp.float32
    assert bool(jnp.all(out >= 0.0))          # ReLU output is non-negative

    ref = unet_conv2_reference(x, params)
    err = jnp.abs(out - ref)
    max_err = float(jnp.max(err))
    mean_err = float(jnp.mean(err))
    # Tolerance loosened vs. the all-f32 version: the MXU now consumes bf16
    # operands (f32 accumulation), giving ~1e-2 relative agreement.
    assert max_err < 8e-2, f"max abs error vs reference: {max_err}"
    assert mean_err < 1e-2, f"mean abs error vs reference: {mean_err}"

    print("KERNEL_OK")
</pallas_src>

<mosaic_0001>
module attributes {stable_mosaic.version = 11 : i64} {
  func.func @kernel(%arg0: i32, %arg1: memref<16x512xf32, #tpu.memory_space<vmem>>, %arg2: memref<9x512xf32, #tpu.memory_space<vmem>>, %arg3: memref<8x144xbf16, #tpu.memory_space<vmem>>, %arg4: memref<8x1xf32, #tpu.memory_space<vmem>>, %arg5: memref<8x1xf32, #tpu.memory_space<vmem>>, %arg6: memref<8x144xbf16, #tpu.memory_space<vmem>>, %arg7: memref<8x1xf32, #tpu.memory_space<vmem>>, %arg8: memref<8x1xf32, #tpu.memory_space<vmem>>, %arg9: memref<8x512xf32, #tpu.memory_space<vmem>>, %arg10: memref<16x768xf32, #tpu.memory_space<vmem>>, %arg11: memref<144x512xbf16, #tpu.memory_space<vmem>>) attributes {dimension_semantics = [#tpu.dimension_semantics<arbitrary>], iteration_bounds = array<i64: 1>, scalar_prefetch = 0 : i64, scratch_operands = 2 : i64, tpu.core_type = #tpu.core_type<tc>, window_params = [{pipeline_mode = #tpu.pipeline_mode<synchronous>, transform_indices = @transform_0, window_bounds = array<i64: 16, 512>}, {pipeline_mode = #tpu.pipeline_mode<synchronous>, transform_indices = @transform_1, window_bounds = array<i64: 9, 512>}, {pipeline_mode = #tpu.pipeline_mode<synchronous>, transform_indices = @transform_2, window_bounds = array<i64: 8, 144>}, {pipeline_mode = #tpu.pipeline_mode<synchronous>, transform_indices = @transform_3, window_bounds = array<i64: 8, 1>}, {pipeline_mode = #tpu.pipeline_mode<synchronous>, transform_indices = @transform_4, window_bounds = array<i64: 8, 1>}, {pipeline_mode = #tpu.pipeline_mode<synchronous>, transform_indices = @transform_5, window_bounds = array<i64: 8, 144>}, {pipeline_mode = #tpu.pipeline_mode<synchronous>, transform_indices = @transform_6, window_bounds = array<i64: 8, 1>}, {pipeline_mode = #tpu.pipeline_mode<synchronous>, transform_indices = @transform_7, window_bounds = array<i64: 8, 1>}, {pipeline_mode = #tpu.pipeline_mode<synchronous>, transform_indices = @transform_8, window_bounds = array<i64: 8, 512>}]} {
    %cst = arith.constant 0.000000e+00 : f32
    %0 = vector.broadcast %cst : f32 to vector<16x128xf32>
    %c0 = arith.constant 0 : index
    %c0_0 = arith.constant 0 : index
    %1 = vector.load %arg10[%c0, %c0_0] : memref<16x768xf32, #tpu.memory_space<vmem>>, vector<16x128xf32>
    tpu.vector_store %arg10[%c0, %c0_0], %0 {strides = array<i32>} : memref<16x768xf32, #tpu.memory_space<vmem>>, vector<16x128xf32>,
    %cst_1 = arith.constant 0.000000e+00 : f32
    %2 = vector.broadcast %cst_1 : f32 to vector<16x128xf32>
    %c0_2 = arith.constant 0 : index
    %c640 = arith.constant 640 : index
    %3 = vector.load %arg10[%c0_2, %c640] : memref<16x768xf32, #tpu.memory_space<vmem>>, vector<16x128xf32>
    tpu.vector_store %arg10[%c0_2, %c640], %2 {strides = array<i32>} : memref<16x768xf32, #tpu.memory_space<vmem>>, vector<16x128xf32>,
    %c0_3 = arith.constant 0 : index
    %c0_4 = arith.constant 0 : index
    %4 = vector.load %arg1[%c0_3, %c0_4] : memref<16x512xf32, #tpu.memory_space<vmem>>, vector<16x512xf32>
    %c0_5 = arith.constant 0 : index
    %c128 = arith.constant 128 : index
    %5 = vector.load %arg10[%c0_5, %c128] : memref<16x768xf32, #tpu.memory_space<vmem>>, vector<16x512xf32>
    tpu.vector_store %arg10[%c0_5, %c128], %4 {strides = array<i32>} : memref<16x768xf32, #tpu.memory_space<vmem>>, vector<16x512xf32>,
    %c0_6 = arith.constant 0 : index
    %c111 = arith.constant 111 : index
    %6 = vector.load %arg10[%c0_6, %c111] : memref<16x768xf32, #tpu.memory_space<vmem>>, vector<16x512xf32>
    %c0_7 = arith.constant 0 : index
    %c0_8 = arith.constant 0 : index
    %7 = vector.load %arg2[%c0_7, %c0_8] : memref<9x512xf32, #tpu.memory_space<vmem>>, vector<1x512xf32>
    %8 = vector.broadcast %7 : vector<1x512xf32> to vector<16x512xf32>
    %9 = arith.mulf %6, %8 : vector<16x512xf32>
    %10 = arith.truncf %9 : vector<16x512xf32> to vector<16x512xbf16>
    %c0_9 = arith.constant 0 : index
    %c0_10 = arith.constant 0 : index
    %11 = vector.load %arg11[%c0_9, %c0_10] : memref<144x512xbf16, #tpu.memory_space<vmem>>, vector<16x512xbf16>
    tpu.vector_store %arg11[%c0_9, %c0_10], %10 {strides = array<i32>} : memref<144x512xbf16, #tpu.memory_space<vmem>>, vector<16x512xbf16>,
    %c0_11 = arith.constant 0 : index
    %c112 = arith.constant 112 : index
    %12 = vector.load %arg10[%c0_11, %c112] : memref<16x768xf32, #tpu.memory_space<vmem>>, vector<16x512xf32>
    %c1 = arith.constant 1 : index
    %c0_12 = arith.constant 0 : index
    %13 = vector.load %arg2[%c1, %c0_12] : memref<9x512xf32, #tpu.memory_space<vmem>>, vector<1x512xf32>
    %14 = vector.broadcast %13 : vector<1x512xf32> to vector<16x512xf32>
    %15 = arith.mulf %12, %14 : vector<16x512xf32>
    %16 = arith.truncf %15 : vector<16x512xf32> to vector<16x512xbf16>
    %c16 = arith.constant 16 : index
    %c0_13 = arith.constant 0 : index
    %17 = vector.load %arg11[%c16, %c0_13] : memref<144x512xbf16, #tpu.memory_space<vmem>>, vector<16x512xbf16>
    tpu.vector_store %arg11[%c16, %c0_13], %16 {strides = array<i32>} : memref<144x512xbf16, #tpu.memory_space<vmem>>, vector<16x512xbf16>,
    %c0_14 = arith.constant 0 : index
    %c113 = arith.constant 113 : index
    %18 = vector.load %arg10[%c0_14, %c113] : memref<16x768xf32, #tpu.memory_space<vmem>>, vector<16x512xf32>
    %c2 = arith.constant 2 : index
    %c0_15 = arith.constant 0 : index
    %19 = vector.load %arg2[%c2, %c0_15] : memref<9x512xf32, #tpu.memory_space<vmem>>, vector<1x512xf32>
    %20 = vector.broadcast %19 : vector<1x512xf32> to vector<16x512xf32>
    %21 = arith.mulf %18, %20 : vector<16x512xf32>
    %22 = arith.truncf %21 : vector<16x512xf32> to vector<16x512xbf16>
    %c32 = arith.constant 32 : index
    %c0_16 = arith.constant 0 : index
    %23 = vector.load %arg11[%c32, %c0_16] : memref<144x512xbf16, #tpu.memory_space<vmem>>, vector<16x512xbf16>
    tpu.vector_store %arg11[%c32, %c0_16], %22 {strides = array<i32>} : memref<144x512xbf16, #tpu.memory_space<vmem>>, vector<16x512xbf16>,
    %c0_17 = arith.constant 0 : index
    %c127 = arith.constant 127 : index
    %24 = vector.load %arg10[%c0_17, %c127] : memref<16x768xf32, #tpu.memory_space<vmem>>, vector<16x512xf32>
    %c3 = arith.constant 3 : index
    %c0_18 = arith.constant 0 : index
    %25 = vector.load %arg2[%c3, %c0_18] : memref<9x512xf32, #tpu.memory_space<vmem>>, vector<1x512xf32>
    %26 = vector.broadcast %25 : vector<1x512xf32> to vector<16x512xf32>
    %27 = arith.mulf %24, %26 : vector<16x512xf32>
    %28 = arith.truncf %27 : vector<16x512xf32> to vector<16x512xbf16>
    %c48 = arith.constant 48 : index
    %c0_19 = arith.constant 0 : index
    %29 = vector.load %arg11[%c48, %c0_19] : memref<144x512xbf16, #tpu.memory_space<vmem>>, vector<16x512xbf16>
    tpu.vector_store %arg11[%c48, %c0_19], %28 {strides = array<i32>} : memref<144x512xbf16, #tpu.memory_space<vmem>>, vector<16x512xbf16>,
    %c0_20 = arith.constant 0 : index
    %c128_21 = arith.constant 128 : index
    %30 = vector.load %arg10[%c0_20, %c128_21] : memref<16x768xf32, #tpu.memory_space<vmem>>, vector<16x512xf32>
    %31 = arith.truncf %30 : vector<16x512xf32> to vector<16x512xbf16>
    %c64 = arith.constant 64 : index
    %c0_22 = arith.constant 0 : index
    %32 = vector.load %arg11[%c64, %c0_22] : memref<144x512xbf16, #tpu.memory_space<vmem>>, vector<16x512xbf16>
    tpu.vector_store %arg11[%c64, %c0_22], %31 {strides = array<i32>} : memref<144x512xbf16, #tpu.memory_space<vmem>>, vector<16x512xbf16>,
    %c0_23 = arith.constant 0 : index
    %c129 = arith.constant 129 : index
    %33 = vector.load %arg10[%c0_23, %c129] : memref<16x768xf32, #tpu.memory_space<vmem>>, vector<16x512xf32>
    %c5 = arith.constant 5 : index
    %c0_24 = arith.constant 0 : index
    %34 = vector.load %arg2[%c5, %c0_24] : memref<9x512xf32, #tpu.memory_space<vmem>>, vector<1x512xf32>
    %35 = vector.broadcast %34 : vector<1x512xf32> to vector<16x512xf32>
    %36 = arith.mulf %33, %35 : vector<16x512xf32>
    %37 = arith.truncf %36 : vector<16x512xf32> to vector<16x512xbf16>
    %c80 = arith.constant 80 : index
    %c0_25 = arith.constant 0 : index
    %38 = vector.load %arg11[%c80, %c0_25] : memref<144x512xbf16, #tpu.memory_space<vmem>>, vector<16x512xbf16>
    tpu.vector_store %arg11[%c80, %c0_25], %37 {strides = array<i32>} : memref<144x512xbf16, #tpu.memory_space<vmem>>, vector<16x512xbf16>,
    %c0_26 = arith.constant 0 : index
    %c143 = arith.constant 143 : index
    %39 = vector.load %arg10[%c0_26, %c143] : memref<16x768xf32, #tpu.memory_space<vmem>>, vector<16x512xf32>
    %c6 = arith.constant 6 : index
    %c0_27 = arith.constant 0 : index
    %40 = vector.load %arg2[%c6, %c0_27] : memref<9x512xf32, #tpu.memory_space<vmem>>, vector<1x512xf32>
    %41 = vector.broadcast %40 : vector<1x512xf32> to vector<16x512xf32>
    %42 = arith.mulf %39, %41 : vector<16x512xf32>
    %43 = arith.truncf %42 : vector<16x512xf32> to vector<16x512xbf16>
    %c96 = arith.constant 96 : index
    %c0_28 = arith.constant 0 : index
    %44 = vector.load %arg11[%c96, %c0_28] : memref<144x512xbf16, #tpu.memory_space<vmem>>, vector<16x512xbf16>
    tpu.vector_store %arg11[%c96, %c0_28], %43 {strides = array<i32>} : memref<144x512xbf16, #tpu.memory_space<vmem>>, vector<16x512xbf16>,
    %c0_29 = arith.constant 0 : index
    %c144 = arith.constant 144 : index
    %45 = vector.load %arg10[%c0_29, %c144] : memref<16x768xf32, #tpu.memory_space<vmem>>, vector<16x512xf32>
    %c7 = arith.constant 7 : index
    %c0_30 = arith.constant 0 : index
    %46 = vector.load %arg2[%c7, %c0_30] : memref<9x512xf32, #tpu.memory_space<vmem>>, vector<1x512xf32>
    %47 = vector.broadcast %46 : vector<1x512xf32> to vector<16x512xf32>
    %48 = arith.mulf %45, %47 : vector<16x512xf32>
    %49 = arith.truncf %48 : vector<16x512xf32> to vector<16x512xbf16>
    %c112_31 = arith.constant 112 : index
    %c0_32 = arith.constant 0 : index
    %50 = vector.load %arg11[%c112_31, %c0_32] : memref<144x512xbf16, #tpu.memory_space<vmem>>, vector<16x512xbf16>
    tpu.vector_store %arg11[%c112_31, %c0_32], %49 {strides = array<i32>} : memref<144x512xbf16, #tpu.memory_space<vmem>>, vector<16x512xbf16>,
    %c0_33 = arith.constant 0 : index
    %c145 = arith.constant 145 : index
    %51 = vector.load %arg10[%c0_33, %c145] : memref<16x768xf32, #tpu.memory_space<vmem>>, vector<16x512xf32>
    %c8 = arith.constant 8 : index
    %c0_34 = arith.constant 0 : index
    %52 = vector.load %arg2[%c8, %c0_34] : memref<9x512xf32, #tpu.memory_space<vmem>>, vector<1x512xf32>
    %53 = vector.broadcast %52 : vector<1x512xf32> to vector<16x512xf32>
    %54 = arith.mulf %51, %53 : vector<16x512xf32>
    %55 = arith.truncf %54 : vector<16x512xf32> to vector<16x512xbf16>
    %c128_35 = arith.constant 128 : index
    %c0_36 = arith.constant 0 : index
    %56 = vector.load %arg11[%c128_35, %c0_36] : memref<144x512xbf16, #tpu.memory_space<vmem>>, vector<16x512xbf16>
    tpu.vector_store %arg11[%c128_35, %c0_36], %55 {strides = array<i32>} : memref<144x512xbf16, #tpu.memory_space<vmem>>, vector<16x512xbf16>,
    %c0_37 = arith.constant 0 : index
    %c0_38 = arith.constant 0 : index
    %57 = vector.load %arg3[%c0_37, %c0_38] : memref<8x144xbf16, #tpu.memory_space<vmem>>, vector<8x144xbf16>
    %c0_39 = arith.constant 0 : index
    %c0_40 = arith.constant 0 : index
    %58 = vector.load %arg11[%c0_39, %c0_40] : memref<144x512xbf16, #tpu.memory_space<vmem>>, vector<144x512xbf16>
    %cst_41 = arith.constant dense<0.000000e+00> : vector<8x512xf32>
    %59 = tpu.matmul %57, %58, %cst_41 {dimension_numbers = #tpu.dot_dimension_numbers<[1], [0], [0], [1], [0, 0, 1, 1], [], []>} : vector<8x144xbf16>, vector<144x512xbf16>, vector<8x512xf32> -> vector<8x512xf32>
    %cst_42 = arith.constant dense<0.000000e+00> : vector<8xf32>
    %60 = vector.multi_reduction <add>, %59, %cst_42 [1] : vector<8x512xf32> to vector<8xf32>
    %61 = vector.shape_cast %60 : vector<8xf32> to vector<8x1xf32>
    %62 = arith.mulf %59, %59 : vector<8x512xf32>
    %cst_43 = arith.constant dense<0.000000e+00> : vector<8xf32>
    %63 = vector.multi_reduction <add>, %62, %cst_43 [1] : vector<8x512xf32> to vector<8xf32>
    %64 = vector.shape_cast %63 : vector<8xf32> to vector<8x1xf32>
    %cst_44 = arith.constant 0.001953125 : f32
    %65 = vector.broadcast %cst_44 : f32 to vector<8x1xf32>
    %66 = arith.mulf %61, %65 : vector<8x1xf32>
    %cst_45 = arith.constant 0.001953125 : f32
    %67 = vector.broadcast %cst_45 : f32 to vector<8x1xf32>
    %68 = arith.mulf %64, %67 : vector<8x1xf32>
    %69 = arith.mulf %66, %66 : vector<8x1xf32>
    %70 = arith.subf %68, %69 : vector<8x1xf32>
    %c0_46 = arith.constant 0 : index
    %c0_47 = arith.constant 0 : index
    %71 = vector.load %arg4[%c0_46, %c0_47] : memref<8x1xf32, #tpu.memory_space<vmem>>, vector<8x1xf32>
    %cst_48 = arith.constant 9.99999974E-6 : f32
    %72 = vector.broadcast %cst_48 : f32 to vector<8x1xf32>
    %73 = arith.addf %70, %72 : vector<8x1xf32>
    %74 = math.rsqrt %73 : vector<8x1xf32>
    %75 = arith.mulf %71, %74 : vector<8x1xf32>
    %c0_49 = arith.constant 0 : index
    %c0_50 = arith.constant 0 : index
    %76 = vector.load %arg5[%c0_49, %c0_50] : memref<8x1xf32, #tpu.memory_space<vmem>>, vector<8x1xf32>
    %77 = arith.mulf %66, %75 : vector<8x1xf32>
    %78 = arith.subf %76, %77 : vector<8x1xf32>
    %79 = vector.broadcast %75 : vector<8x1xf32> to vector<8x512xf32>
    %80 = arith.mulf %59, %79 : vector<8x512xf32>
    %81 = vector.broadcast %78 : vector<8x1xf32> to vector<8x512xf32>
    %82 = arith.addf %80, %81 : vector<8x512xf32>
    %cst_51 = arith.constant 0.000000e+00 : f32
    %83 = vector.broadcast %cst_51 : f32 to vector<8x512xf32>
    %84 = arith.maximumf %82, %83 : vector<8x512xf32>
    %c0_52 = arith.constant 0 : index
    %c128_53 = arith.constant 128 : index
    %85 = vector.load %arg10[%c0_52, %c128_53] : memref<16x768xf32, #tpu.memory_space<vmem>>, vector<8x512xf32>
    tpu.vector_store %arg10[%c0_52, %c128_53], %84 {strides = array<i32>} : memref<16x768xf32, #tpu.memory_space<vmem>>, vector<8x512xf32>,
    %c0_54 = arith.constant 0 : index
    %c111_55 = arith.constant 111 : index
    %86 = vector.load %arg10[%c0_54, %c111_55] : memref<16x768xf32, #tpu.memory_space<vmem>>, vector<16x512xf32>
    %c0_56 = arith.constant 0 : index
    %c0_57 = arith.constant 0 : index
    %87 = vector.load %arg2[%c0_56, %c0_57] : memref<9x512xf32, #tpu.memory_space<vmem>>, vector<1x512xf32>
    %88 = vector.broadcast %87 : vector<1x512xf32> to vector<16x512xf32>
    %89 = arith.mulf %86, %88 : vector<16x512xf32>
    %90 = arith.truncf %89 : vector<16x512xf32> to vector<16x512xbf16>
    %c0_58 = arith.constant 0 : index
    %c0_59 = arith.constant 0 : index
    %91 = vector.load %arg11[%c0_58, %c0_59] : memref<144x512xbf16, #tpu.memory_space<vmem>>, vector<16x512xbf16>
    tpu.vector_store %arg11[%c0_58, %c0_59], %90 {strides = array<i32>} : memref<144x512xbf16, #tpu.memory_space<vmem>>, vector<16x512xbf16>,
    %c0_60 = arith.constant 0 : index
    %c112_61 = arith.constant 112 : index
    %92 = vector.load %arg10[%c0_60, %c112_61] : memref<16x768xf32, #tpu.memory_space<vmem>>, vector<16x512xf32>
    %c1_62 = arith.constant 1 : index
    %c0_63 = arith.constant 0 : index
    %93 = vector.load %arg2[%c1_62, %c0_63] : memref<9x512xf32, #tpu.memory_space<vmem>>, vector<1x512xf32>
    %94 = vector.broadcast %93 : vector<1x512xf32> to vector<16x512xf32>
    %95 = arith.mulf %92, %94 : vector<16x512xf32>
    %96 = arith.truncf %95 : vector<16x512xf32> to vector<16x512xbf16>
    %c16_64 = arith.constant 16 : index
    %c0_65 = arith.constant 0 : index
    %97 = vector.load %arg11[%c16_64, %c0_65] : memref<144x512xbf16, #tpu.memory_space<vmem>>, vector<16x512xbf16>
    tpu.vector_store %arg11[%c16_64, %c0_65], %96 {strides = array<i32>} : memref<144x512xbf16, #tpu.memory_space<vmem>>, vector<16x512xbf16>,
    %c0_66 = arith.constant 0 : index
    %c113_67 = arith.constant 113 : index
    %98 = vector.load %arg10[%c0_66, %c113_67] : memref<16x768xf32, #tpu.memory_space<vmem>>, vector<16x512xf32>
    %c2_68 = arith.constant 2 : index
    %c0_69 = arith.constant 0 : index
    %99 = vector.load %arg2[%c2_68, %c0_69] : memref<9x512xf32, #tpu.memory_space<vmem>>, vector<1x512xf32>
    %100 = vector.broadcast %99 : vector<1x512xf32> to vector<16x512xf32>
    %101 = arith.mulf %98, %100 : vector<16x512xf32>
    %102 = arith.truncf %101 : vector<16x512xf32> to vector<16x512xbf16>
    %c32_70 = arith.constant 32 : index
    %c0_71 = arith.constant 0 : index
    %103 = vector.load %arg11[%c32_70, %c0_71] : memref<144x512xbf16, #tpu.memory_space<vmem>>, vector<16x512xbf16>
    tpu.vector_store %arg11[%c32_70, %c0_71], %102 {strides = array<i32>} : memref<144x512xbf16, #tpu.memory_space<vmem>>, vector<16x512xbf16>,
    %c0_72 = arith.constant 0 : index
    %c127_73 = arith.constant 127 : index
    %104 = vector.load %arg10[%c0_72, %c127_73] : memref<16x768xf32, #tpu.memory_space<vmem>>, vector<16x512xf32>
    %c3_74 = arith.constant 3 : index
    %c0_75 = arith.constant 0 : index
    %105 = vector.load %arg2[%c3_74, %c0_75] : memref<9x512xf32, #tpu.memory_space<vmem>>, vector<1x512xf32>
    %106 = vector.broadcast %105 : vector<1x512xf32> to vector<16x512xf32>
    %107 = arith.mulf %104, %106 : vector<16x512xf32>
    %108 = arith.truncf %107 : vector<16x512xf32> to vector<16x512xbf16>
    %c48_76 = arith.constant 48 : index
    %c0_77 = arith.constant 0 : index
    %109 = vector.load %arg11[%c48_76, %c0_77] : memref<144x512xbf16, #tpu.memory_space<vmem>>, vector<16x512xbf16>
    tpu.vector_store %arg11[%c48_76, %c0_77], %108 {strides = array<i32>} : memref<144x512xbf16, #tpu.memory_space<vmem>>, vector<16x512xbf16>,
    %c0_78 = arith.constant 0 : index
    %c128_79 = arith.constant 128 : index
    %110 = vector.load %arg10[%c0_78, %c128_79] : memref<16x768xf32, #tpu.memory_space<vmem>>, vector<16x512xf32>
    %111 = arith.truncf %110 : vector<16x512xf32> to vector<16x512xbf16>
    %c64_80 = arith.constant 64 : index
    %c0_81 = arith.constant 0 : index
    %112 = vector.load %arg11[%c64_80, %c0_81] : memref<144x512xbf16, #tpu.memory_space<vmem>>, vector<16x512xbf16>
    tpu.vector_store %arg11[%c64_80, %c0_81], %111 {strides = array<i32>} : memref<144x512xbf16, #tpu.memory_space<vmem>>, vector<16x512xbf16>,
    %c0_82 = arith.constant 0 : index
    %c129_83 = arith.constant 129 : index
    %113 = vector.load %arg10[%c0_82, %c129_83] : memref<16x768xf32, #tpu.memory_space<vmem>>, vector<16x512xf32>
    %c5_84 = arith.constant 5 : index
    %c0_85 = arith.constant 0 : index
    %114 = vector.load %arg2[%c5_84, %c0_85] : memref<9x512xf32, #tpu.memory_space<vmem>>, vector<1x512xf32>
    %115 = vector.broadcast %114 : vector<1x512xf32> to vector<16x512xf32>
    %116 = arith.mulf %113, %115 : vector<16x512xf32>
    %117 = arith.truncf %116 : vector<16x512xf32> to vector<16x512xbf16>
    %c80_86 = arith.constant 80 : index
    %c0_87 = arith.constant 0 : index
    %118 = vector.load %arg11[%c80_86, %c0_87] : memref<144x512xbf16, #tpu.memory_space<vmem>>, vector<16x512xbf16>
    tpu.vector_store %arg11[%c80_86, %c0_87], %117 {strides = array<i32>} : memref<144x512xbf16, #tpu.memory_space<vmem>>, vector<16x512xbf16>,
    %c0_88 = arith.constant 0 : index
    %c143_89 = arith.constant 143 : index
    %119 = vector.load %arg10[%c0_88, %c143_89] : memref<16x768xf32, #tpu.memory_space<vmem>>, vector<16x512xf32>
    %c6_90 = arith.constant 6 : index
    %c0_91 = arith.constant 0 : index
    %120 = vector.load %arg2[%c6_90, %c0_91] : memref<9x512xf32, #tpu.memory_space<vmem>>, vector<1x512xf32>
    %121 = vector.broadcast %120 : vector<1x512xf32> to vector<16x512xf32>
    %122 = arith.mulf %119, %121 : vector<16x512xf32>
    %123 = arith.truncf %122 : vector<16x512xf32> to vector<16x512xbf16>
    %c96_92 = arith.constant 96 : index
    %c0_93 = arith.constant 0 : index
    %124 = vector.load %arg11[%c96_92, %c0_93] : memref<144x512xbf16, #tpu.memory_space<vmem>>, vector<16x512xbf16>
    tpu.vector_store %arg11[%c96_92, %c0_93], %123 {strides = array<i32>} : memref<144x512xbf16, #tpu.memory_space<vmem>>, vector<16x512xbf16>,
    %c0_94 = arith.constant 0 : index
    %c144_95 = arith.constant 144 : index
    %125 = vector.load %arg10[%c0_94, %c144_95] : memref<16x768xf32, #tpu.memory_space<vmem>>, vector<16x512xf32>
    %c7_96 = arith.constant 7 : index
    %c0_97 = arith.constant 0 : index
    %126 = vector.load %arg2[%c7_96, %c0_97] : memref<9x512xf32, #tpu.memory_space<vmem>>, vector<1x512xf32>
    %127 = vector.broadcast %126 : vector<1x512xf32> to vector<16x512xf32>
    %128 = arith.mulf %125, %127 : vector<16x512xf32>
    %129 = arith.truncf %128 : vector<16x512xf32> to vector<16x512xbf16>
    %c112_98 = arith.constant 112 : index
    %c0_99 = arith.constant 0 : index
    %130 = vector.load %arg11[%c112_98, %c0_99] : memref<144x512xbf16, #tpu.memory_space<vmem>>, vector<16x512xbf16>
    tpu.vector_store %arg11[%c112_98, %c0_99], %129 {strides = array<i32>} : memref<144x512xbf16, #tpu.memory_space<vmem>>, vector<16x512xbf16>,
    %c0_100 = arith.constant 0 : index
    %c145_101 = arith.constant 145 : index
    %131 = vector.load %arg10[%c0_100, %c145_101] : memref<16x768xf32, #tpu.memory_space<vmem>>, vector<16x512xf32>
    %c8_102 = arith.constant 8 : index
    %c0_103 = arith.constant 0 : index
    %132 = vector.load %arg2[%c8_102, %c0_103] : memref<9x512xf32, #tpu.memory_space<vmem>>, vector<1x512xf32>
    %133 = vector.broadcast %132 : vector<1x512xf32> to vector<16x512xf32>
    %134 = arith.mulf %131, %133 : vector<16x512xf32>
    %135 = arith.truncf %134 : vector<16x512xf32> to vector<16x512xbf16>
    %c128_104 = arith.constant 128 : index
    %c0_105 = arith.constant 0 : index
    %136 = vector.load %arg11[%c128_104, %c0_105] : memref<144x512xbf16, #tpu.memory_space<vmem>>, vector<16x512xbf16>
    tpu.vector_store %arg11[%c128_104, %c0_105], %135 {strides = array<i32>} : memref<144x512xbf16, #tpu.memory_space<vmem>>, vector<16x512xbf16>,
    %c0_106 = arith.constant 0 : index
    %c0_107 = arith.constant 0 : index
    %137 = vector.load %arg6[%c0_106, %c0_107] : memref<8x144xbf16, #tpu.memory_space<vmem>>, vector<8x144xbf16>
    %c0_108 = arith.constant 0 : index
    %c0_109 = arith.constant 0 : index
    %138 = vector.load %arg11[%c0_108, %c0_109] : memref<144x512xbf16, #tpu.memory_space<vmem>>, vector<144x512xbf16>
    %cst_110 = arith.constant dense<0.000000e+00> : vector<8x512xf32>
    %139 = tpu.matmul %137, %138, %cst_110 {dimension_numbers = #tpu.dot_dimension_numbers<[1], [0], [0], [1], [0, 0, 1, 1], [], []>} : vector<8x144xbf16>, vector<144x512xbf16>, vector<8x512xf32> -> vector<8x512xf32>
    %cst_111 = arith.constant dense<0.000000e+00> : vector<8xf32>
    %140 = vector.multi_reduction <add>, %139, %cst_111 [1] : vector<8x512xf32> to vector<8xf32>
    %141 = vector.shape_cast %140 : vector<8xf32> to vector<8x1xf32>
    %142 = arith.mulf %139, %139 : vector<8x512xf32>
    %cst_112 = arith.constant dense<0.000000e+00> : vector<8xf32>
    %143 = vector.multi_reduction <add>, %142, %cst_112 [1] : vector<8x512xf32> to vector<8xf32>
    %144 = vector.shape_cast %143 : vector<8xf32> to vector<8x1xf32>
    %cst_113 = arith.constant 0.001953125 : f32
    %145 = vector.broadcast %cst_113 : f32 to vector<8x1xf32>
    %146 = arith.mulf %141, %145 : vector<8x1xf32>
    %cst_114 = arith.constant 0.001953125 : f32
    %147 = vector.broadcast %cst_114 : f32 to vector<8x1xf32>
    %148 = arith.mulf %144, %147 : vector<8x1xf32>
    %149 = arith.mulf %146, %146 : vector<8x1xf32>
    %150 = arith.subf %148, %149 : vector<8x1xf32>
    %c0_115 = arith.constant 0 : index
    %c0_116 = arith.constant 0 : index
    %151 = vector.load %arg7[%c0_115, %c0_116] : memref<8x1xf32, #tpu.memory_space<vmem>>, vector<8x1xf32>
    %cst_117 = arith.constant 9.99999974E-6 : f32
    %152 = vector.broadcast %cst_117 : f32 to vector<8x1xf32>
    %153 = arith.addf %150, %152 : vector<8x1xf32>
    %154 = math.rsqrt %153 : vector<8x1xf32>
    %155 = arith.mulf %151, %154 : vector<8x1xf32>
    %c0_118 = arith.constant 0 : index
    %c0_119 = arith.constant 0 : index
    %156 = vector.load %arg8[%c0_118, %c0_119] : memref<8x1xf32, #tpu.memory_space<vmem>>, vector<8x1xf32>
    %157 = arith.mulf %146, %155 : vector<8x1xf32>
    %158 = arith.subf %156, %157 : vector<8x1xf32>
    %159 = vector.broadcast %155 : vector<8x1xf32> to vector<8x512xf32>
    %160 = arith.mulf %139, %159 : vector<8x512xf32>
    %161 = vector.broadcast %158 : vector<8x1xf32> to vector<8x512xf32>
    %162 = arith.addf %160, %161 : vector<8x512xf32>
    %cst_120 = arith.constant 0.000000e+00 : f32
    %163 = vector.broadcast %cst_120 : f32 to vector<8x512xf32>
    %164 = arith.maximumf %162, %163 : vector<8x512xf32>
    %c0_121 = arith.constant 0 : index
    %c0_122 = arith.constant 0 : index
    %165 = vector.load %arg9[%c0_121, %c0_122] : memref<8x512xf32, #tpu.memory_space<vmem>>, vector<8x512xf32>
    tpu.vector_store %arg9[%c0_121, %c0_122], %164 {strides = array<i32>} : memref<8x512xf32, #tpu.memory_space<vmem>>, vector<8x512xf32>,
    return
  }
  func.func @transform_0(%arg0: i32) -> (i32, i32) {
    %c0_i32 = arith.constant 0 : i32
    %c0_i32_0 = arith.constant 0 : i32
    %c0_i32_1 = arith.constant 0 : i32
    return %c0_i32, %c0_i32_0 : i32, i32
  }
  func.func @transform_1(%arg0: i32) -> (i32, i32) {
    %c0_i32 = arith.constant 0 : i32
    %c0_i32_0 = arith.constant 0 : i32
    %c0_i32_1 = arith.constant 0 : i32
    return %c0_i32, %c0_i32_0 : i32, i32
  }
  func.func @transform_2(%arg0: i32) -> (i32, i32) {
    %c0_i32 = arith.constant 0 : i32
    %c0_i32_0 = arith.constant 0 : i32
    %c0_i32_1 = arith.constant 0 : i32
    return %c0_i32, %c0_i32_0 : i32, i32
  }
  func.func @transform_3(%arg0: i32) -> (i32, i32) {
    %c0_i32 = arith.constant 0 : i32
    %c0_i32_0 = arith.constant 0 : i32
    %c0_i32_1 = arith.constant 0 : i32
    return %c0_i32, %c0_i32_0 : i32, i32
  }
  func.func @transform_4(%arg0: i32) -> (i32, i32) {
    %c0_i32 = arith.constant 0 : i32
    %c0_i32_0 = arith.constant 0 : i32
    %c0_i32_1 = arith.constant 0 : i32
    return %c0_i32, %c0_i32_0 : i32, i32
  }
  func.func @transform_5(%arg0: i32) -> (i32, i32) {
    %c0_i32 = arith.constant 0 : i32
    %c0_i32_0 = arith.constant 0 : i32
    %c0_i32_1 = arith.constant 0 : i32
    return %c0_i32, %c0_i32_0 : i32, i32
  }
  func.func @transform_6(%arg0: i32) -> (i32, i32) {
    %c0_i32 = arith.constant 0 : i32
    %c0_i32_0 = arith.constant 0 : i32
    %c0_i32_1 = arith.constant 0 : i32
    return %c0_i32, %c0_i32_0 : i32, i32
  }
  func.func @transform_7(%arg0: i32) -> (i32, i32) {
    %c0_i32 = arith.constant 0 : i32
    %c0_i32_0 = arith.constant 0 : i32
    %c0_i32_1 = arith.constant 0 : i32
    return %c0_i32, %c0_i32_0 : i32, i32
  }
  func.func @transform_8(%arg0: i32) -> (i32, i32) {
    %c0_i32 = arith.constant 0 : i32
    %c0_i32_0 = arith.constant 0 : i32
    %c0_i32_1 = arith.constant 0 : i32
    return %c0_i32, %c0_i32_0 : i32, i32
  }
}

</mosaic_0001>

<llo_original>
// kernel: unet_conv2_forward.1
$region0: #{unet_conv2_forward.1}
  #allocation0 [shape = 'u32[]', space=smem, size = 0x4, offset = 0x4, fixed_abs, tag = 'smem constant byte address 0x4 - core index']
  #allocation1 [shape = 'u32[144,128]{1,0:T(1,128)}', space=vmem, size = 0x12000, scoped, tag = 'internal scratch']
  #allocation2 [shape = 'f32[16,768]{1,0:T(8,128)}', space=vmem, size = 0xc000, scoped, tag = 'scratch operand']
  #allocation3 [shape = 'bf16[144,512]{1,0:T(8,128)(2,1)}', space=vmem, size = 0x24000, scoped, tag = 'scratch operand']
  %s0 = inlined_call_operand.vmem [shape: f32[16,512], index: 0, kind: input, shape index: {}]
  %s1 = inlined_call_operand.vmem [shape: f32[9,512], index: 1, kind: input, shape index: {}]
  %s2 = inlined_call_operand.vmem [shape: bf16[8,144], index: 2, kind: input, shape index: {}]
  %s3 = inlined_call_operand.vmem [shape: f32[8,1], index: 3, kind: input, shape index: {}]
  %s4 = inlined_call_operand.vmem [shape: f32[8,1], index: 4, kind: input, shape index: {}]
  %s5 = inlined_call_operand.vmem [shape: bf16[8,144], index: 5, kind: input, shape index: {}]
  %s6 = inlined_call_operand.vmem [shape: f32[8,1], index: 6, kind: input, shape index: {}]
  %s7 = inlined_call_operand.vmem [shape: f32[8,1], index: 7, kind: input, shape index: {}]
  %s8 = inlined_call_operand.vmem [shape: f32[8,512], index: 8, kind: output, shape index: {}]
  %s9 = sld [smem:[#allocation0]]
  $region42: #{unet_conv2_forward.1} parent=0
    _
  %s11 = ssub.s32 1, %s9
  %s12 = scalar_select 0, %s11, %s9
  // Predicated region
  $region2: #{unet_conv2_forward.1} parent=0 // pred_check
    _
  $region3: #{unet_conv2_forward.1} parent=0 // pred_check_branch
    %14 = sbr.rel (0) target = $region5
  $region4: #{unet_conv2_forward.1} parent=0 // pred_region
    _
  $region5: #{unet_conv2_forward.1} parent=0 // pred_fallthru
    _
  // Predicated region
  $region6: #{unet_conv2_forward.1} parent=0 // pred_check
    _
  $region7: #{unet_conv2_forward.1} parent=0 // pred_check_branch
    %16 = sbr.rel (0) target = $region9
  $region8: #{unet_conv2_forward.1} parent=0 // pred_region
    _
  $region9: #{unet_conv2_forward.1} parent=0 // pred_fallthru
    _
  // Predicated region
  $region10: #{unet_conv2_forward.1} parent=0 // pred_check
    _
  $region11: #{unet_conv2_forward.1} parent=0 // pred_check_branch
    %18 = sbr.rel (0) target = $region13
  $region12: #{unet_conv2_forward.1} parent=0 // pred_region
    _
  $region13: #{unet_conv2_forward.1} parent=0 // pred_fallthru
    _
  // Predicated region
  $region14: #{unet_conv2_forward.1} parent=0 // pred_check
    _
  $region15: #{unet_conv2_forward.1} parent=0 // pred_check_branch
    %20 = sbr.rel (0) target = $region17
  $region16: #{unet_conv2_forward.1} parent=0 // pred_region
    _
  $region17: #{unet_conv2_forward.1} parent=0 // pred_fallthru
    _
  // Predicated region
  $region18: #{unet_conv2_forward.1} parent=0 // pred_check
    _
  $region19: #{unet_conv2_forward.1} parent=0 // pred_check_branch
    %22 = sbr.rel (0) target = $region21
  $region20: #{unet_conv2_forward.1} parent=0 // pred_region
    _
  $region21: #{unet_conv2_forward.1} parent=0 // pred_fallthru
    _
  // Predicated region
  $region22: #{unet_conv2_forward.1} parent=0 // pred_check
    _
  $region23: #{unet_conv2_forward.1} parent=0 // pred_check_branch
    %24 = sbr.rel (0) target = $region25
  $region24: #{unet_conv2_forward.1} parent=0 // pred_region
    _
  $region25: #{unet_conv2_forward.1} parent=0 // pred_fallthru
    _
  // Predicated region
  $region26: #{unet_conv2_forward.1} parent=0 // pred_check
    _
  $region27: #{unet_conv2_forward.1} parent=0 // pred_check_branch
    %26 = sbr.rel (0) target = $region29
  $region28: #{unet_conv2_forward.1} parent=0 // pred_region
    _
  $region29: #{unet_conv2_forward.1} parent=0 // pred_fallthru
    _
  // Predicated region
  $region30: #{unet_conv2_forward.1} parent=0 // pred_check
    _
  $region31: #{unet_conv2_forward.1} parent=0 // pred_check_branch
    %28 = sbr.rel (0) target = $region33
  $region32: #{unet_conv2_forward.1} parent=0 // pred_region
    _
  $region33: #{unet_conv2_forward.1} parent=0 // pred_fallthru
    _
  %30 = vst [vmem:[#allocation2] sm:$0xff] 0.0
  %31 = vst [vmem:[#allocation2 + $0x30] sm:$0xff] 0.0
  %32 = vst [vmem:[#allocation2 + $0x28] sm:$0xff] 0.0
  %33 = vst [vmem:[#allocation2 + $0x58] sm:$0xff] 0.0
  %v34 = vld [vmem:[%s0] sm:$0xff]
  %v35 = vld [vmem:[%s0 + $0x8] sm:$0xff]
  %v36 = vld [vmem:[%s0 + $0x10] sm:$0xff]
  %v37 = vld [vmem:[%s0 + $0x18] sm:$0xff]
  %v38 = vld [vmem:[%s0 + $0x20] sm:$0xff]
  %v39 = vld [vmem:[%s0 + $0x28] sm:$0xff]
  %v40 = vld [vmem:[%s0 + $0x30] sm:$0xff]
  %v41 = vld [vmem:[%s0 + $0x38] sm:$0xff]
  %42 = vst [vmem:[#allocation2 + $0x8] sm:$0xff] %v34
  %43 = vst [vmem:[#allocation2 + $0x10] sm:$0xff] %v35
  %44 = vst [vmem:[#allocation2 + $0x18] sm:$0xff] %v36
  %45 = vst [vmem:[#allocation2 + $0x20] sm:$0xff] %v37
  %46 = vst [vmem:[#allocation2 + $0x38] sm:$0xff] %v38
  %47 = vst [vmem:[#allocation2 + $0x40] sm:$0xff] %v39
  %48 = vst [vmem:[#allocation2 + $0x48] sm:$0xff] %v40
  %49 = vst [vmem:[#allocation2 + $0x50] sm:$0xff] %v41
  %v50 = vld [vmem:[#allocation2] sm:$0xff]
  %v51 = vld [vmem:[#allocation2 + $0x8] sm:$0xff]
  %v52 = vld [vmem:[#allocation2 + $0x10] sm:$0xff]
  %v53 = vld [vmem:[#allocation2 + $0x18] sm:$0xff]
  %v54 = vld [vmem:[#allocation2 + $0x20] sm:$0xff]
  %v55 = vld [vmem:[#allocation2 + $0x30] sm:$0xff]
  %v56 = vld [vmem:[#allocation2 + $0x38] sm:$0xff]
  %v57 = vld [vmem:[#allocation2 + $0x40] sm:$0xff]
  %v58 = vld [vmem:[#allocation2 + $0x48] sm:$0xff]
  %v59 = vld [vmem:[#allocation2 + $0x50] sm:$0xff]
  %v60 = vld [vmem:[%s1] ss:$8 sm:$0xf]
  %v62 = vlaneseq
  %v63 = vshrl.u32 %v62, 7
  %v64 = vsub.s32 0, %v63
  %v65 = vrot.slane %v60, %v64
  %v66 = vlaneseq
  %v67 = vshrl.u32 %v66, 7
  %v68 = vsub.s32 1, %v67
  %v69 = vrot.slane %v60, %v68
  %v70 = vlaneseq
  %v71 = vshrl.u32 %v70, 7
  %v72 = vsub.s32 2, %v71
  %v73 = vrot.slane %v60, %v72
  %v74 = vlaneseq
  %v75 = vshrl.u32 %v74, 7
  %v76 = vsub.s32 3, %v75
  %v77 = vrot.slane %v60, %v76
  %78 = vrot.lane.b32.xlu0 %v65, 111
  %v79 = vpop.permute.xlu0 %78
  %80 = vrot.lane.b32.xlu0 %v69, 111
  %v81 = vpop.permute.xlu0 %80
  %82 = vrot.lane.b32.xlu0 %v73, 111
  %v83 = vpop.permute.xlu0 %82
  %84 = vrot.lane.b32.xlu0 %v77, 111
  %v85 = vpop.permute.xlu0 %84
  %vm86 = vcmask 908288
  %v87 = vsel %vm86, %v79, %v81
  %v88 = vsel %vm86, %v81, %v83
  %v89 = vsel %vm86, %v83, %v85
  %v95 = vmul.f32 %v50, %v79
  %v96 = vmul.f32 %v51, %v87
  %v97 = vmul.f32 %v52, %v88
  %v98 = vmul.f32 %v53, %v89
  %v99 = vmul.f32 %v54, %v85
  %v100 = vmul.f32 %v55, %v79
  %v101 = vmul.f32 %v56, %v87
  %v102 = vmul.f32 %v57, %v88
  %v103 = vmul.f32 %v58, %v89
  %v104 = vmul.f32 %v59, %v85
  %v105 = vpack.c.bf16 %v100, %v95
  %v106 = vpack.c.bf16 %v101, %v96
  %v107 = vpack.c.bf16 %v102, %v97
  %v108 = vpack.c.bf16 %v103, %v98
  %v109 = vpack.c.bf16 %v104, %v99
  %v115 = vunpack.c.l.b16 %v105
  %v116 = vunpack.c.l.b16 %v106
  %v117 = vunpack.c.l.b16 %v107
  %v118 = vunpack.c.l.b16 %v108
  %v119 = vunpack.c.l.b16 %v109
  %v120 = vunpack.c.h.b16 %v105
  %v121 = vunpack.c.h.b16 %v106
  %v122 = vunpack.c.h.b16 %v107
  %v123 = vunpack.c.h.b16 %v108
  %v124 = vunpack.c.h.b16 %v109
  %v125 = vpack.c.b16 %v116, %v115
  %v126 = vpack.c.b16 %v118, %v117
  %v127 = vpack.c.b16 %v119, %v119
  %v128 = vpack.c.b16 %v121, %v120
  %v129 = vpack.c.b16 %v123, %v122
  %v130 = vpack.c.b16 %v124, %v124
  %131 = vrot.lane.b32.xlu0 %v125, 17
  %v132 = vpop.permute.xlu0 %131
  %133 = vrot.lane.b32.xlu0 %v126, 17
  %v134 = vpop.permute.xlu0 %133
  %135 = vrot.lane.b32.xlu0 %v127, 17
  %v136 = vpop.permute.xlu0 %135
  %137 = vrot.lane.b32.xlu0 %v128, 17
  %v138 = vpop.permute.xlu0 %137
  %139 = vrot.lane.b32.xlu0 %v129, 17
  %v140 = vpop.permute.xlu0 %139
  %141 = vrot.lane.b32.xlu0 %v130, 17
  %v142 = vpop.permute.xlu0 %141
  %v143 = vrot.slane %v132, 4
  %v144 = vrot.slane %v134, 4
  %v145 = vrot.slane %v136, 4
  %v146 = vrot.slane %v138, 4
  %v147 = vrot.slane %v140, 4
  %v148 = vrot.slane %v142, 4
  %vm149 = vcmask 1043456
  %v150 = vsel %vm149, %v143, %v144
  %vm151 = vcmask 138240
  %v152 = vsel %vm151, %v132, %v150
  %v153 = vsel %vm149, %v144, %v145
  %v154 = vsel %vm151, %v134, %v153
  %v155 = vsel %vm149, %v146, %v147
  %v156 = vsel %vm151, %v138, %v155
  %v157 = vsel %vm149, %v147, %v148
  %v158 = vsel %vm151, %v140, %v157
  %163 = vst [vmem:[#allocation3] sm:$0xff] %v152
  %164 = vst [vmem:[#allocation3 + $0x8] sm:$0xff] %v154
  %165 = vst [vmem:[#allocation3 + $0x10] sm:$0xff] %v156
  %166 = vst [vmem:[#allocation3 + $0x18] sm:$0xff] %v158
  %v167 = vld [vmem:[#allocation2] sm:$0xff]
  %v168 = vld [vmem:[#allocation2 + $0x8] sm:$0xff]
  %v169 = vld [vmem:[#allocation2 + $0x10] sm:$0xff]
  %v170 = vld [vmem:[#allocation2 + $0x18] sm:$0xff]
  %v171 = vld [vmem:[#allocation2 + $0x20] sm:$0xff]
  %v172 = vld [vmem:[#allocation2 + $0x30] sm:$0xff]
  %v173 = vld [vmem:[#allocation2 + $0x38] sm:$0xff]
  %v174 = vld [vmem:[#allocation2 + $0x40] sm:$0xff]
  %v175 = vld [vmem:[#allocation2 + $0x48] sm:$0xff]
  %v176 = vld [vmem:[#allocation2 + $0x50] sm:$0xff]
  %s177 = scalar_lea.vmem %s1, 1
  %v178 = vld [vmem:[%s177] ss:$8 sm:$0xf]
  %v180 = vlaneseq
  %v181 = vshrl.u32 %v180, 7
  %v182 = vsub.s32 0, %v181
  %v183 = vrot.slane %v178, %v182
  %v184 = vlaneseq
  %v185 = vshrl.u32 %v184, 7
  %v186 = vsub.s32 1, %v185
  %v187 = vrot.slane %v178, %v186
  %v188 = vlaneseq
  %v189 = vshrl.u32 %v188, 7
  %v190 = vsub.s32 2, %v189
  %v191 = vrot.slane %v178, %v190
  %v192 = vlaneseq
  %v193 = vshrl.u32 %v192, 7
  %v194 = vsub.s32 3, %v193
  %v195 = vrot.slane %v178, %v194
  %196 = vrot.lane.b32.xlu0 %v183, 112
  %v197 = vpop.permute.xlu0 %196
  %198 = vrot.lane.b32.xlu0 %v187, 112
  %v199 = vpop.permute.xlu0 %198
  %200 = vrot.lane.b32.xlu0 %v191, 112
  %v201 = vpop.permute.xlu0 %200
  %202 = vrot.lane.b32.xlu0 %v195, 112
  %v203 = vpop.permute.xlu0 %202
  %vm204 = vcmask 916480
  %v205 = vsel %vm204, %v197, %v199
  %v206 = vsel %vm204, %v199, %v201
  %v207 = vsel %vm204, %v201, %v203
  %v213 = vmul.f32 %v167, %v197
  %v214 = vmul.f32 %v168, %v205
  %v215 = vmul.f32 %v169, %v206
  %v216 = vmul.f32 %v170, %v207
  %v217 = vmul.f32 %v171, %v203
  %v218 = vmul.f32 %v172, %v197
  %v219 = vmul.f32 %v173, %v205
  %v220 = vmul.f32 %v174, %v206
  %v221 = vmul.f32 %v175, %v207
  %v222 = vmul.f32 %v176, %v203
  %v223 = vpack.c.bf16 %v218, %v213
  %v224 = vpack.c.bf16 %v219, %v214
  %v225 = vpack.c.bf16 %v220, %v215
  %v226 = vpack.c.bf16 %v221, %v216
  %v227 = vpack.c.bf16 %v222, %v217
  %v233 = vunpack.c.l.b16 %v223
  %v234 = vunpack.c.l.b16 %v224
  %v235 = vunpack.c.l.b16 %v225
  %v236 = vunpack.c.l.b16 %v226
  %v237 = vunpack.c.l.b16 %v227
  %v238 = vunpack.c.h.b16 %v223
  %v239 = vunpack.c.h.b16 %v224
  %v240 = vunpack.c.h.b16 %v225
  %v241 = vunpack.c.h.b16 %v226
  %v242 = vunpack.c.h.b16 %v227
  %v243 = vpack.c.b16 %v234, %v233
  %v244 = vpack.c.b16 %v236, %v235
  %v245 = vpack.c.b16 %v237, %v237
  %v246 = vpack.c.b16 %v239, %v238
  %v247 = vpack.c.b16 %v241, %v240
  %v248 = vpack.c.b16 %v242, %v242
  %249 = vrot.lane.b32.xlu0 %v243, 16
  %v250 = vpop.permute.xlu0 %249
  %251 = vrot.lane.b32.xlu0 %v244, 16
  %v252 = vpop.permute.xlu0 %251
  %253 = vrot.lane.b32.xlu0 %v245, 16
  %v254 = vpop.permute.xlu0 %253
  %255 = vrot.lane.b32.xlu0 %v246, 16
  %v256 = vpop.permute.xlu0 %255
  %257 = vrot.lane.b32.xlu0 %v247, 16
  %v258 = vpop.permute.xlu0 %257
  %259 = vrot.lane.b32.xlu0 %v248, 16
  %v260 = vpop.permute.xlu0 %259
  %v261 = vrot.slane %v250, 4
  %v262 = vrot.slane %v252, 4
  %v263 = vrot.slane %v254, 4
  %v264 = vrot.slane %v256, 4
  %v265 = vrot.slane %v258, 4
  %v266 = vrot.slane %v260, 4
  %v267 = vsel %vm149, %v261, %v262
  %vm268 = vcmask 130048
  %v269 = vsel %vm268, %v250, %v267
  %v270 = vsel %vm149, %v262, %v263
  %v271 = vsel %vm268, %v252, %v270
  %v272 = vsel %vm149, %v264, %v265
  %v273 = vsel %vm268, %v256, %v272
  %v274 = vsel %vm149, %v265, %v266
  %v275 = vsel %vm268, %v258, %v274
  %280 = vst [vmem:[#allocation3 + $0x20] sm:$0xff] %v269
  %281 = vst [vmem:[#allocation3 + $0x28] sm:$0xff] %v271
  %282 = vst [vmem:[#allocation3 + $0x30] sm:$0xff] %v273
  %283 = vst [vmem:[#allocation3 + $0x38] sm:$0xff] %v275
  %v284 = vld [vmem:[#allocation2] sm:$0xff]
  %v285 = vld [vmem:[#allocation2 + $0x8] sm:$0xff]
  %v286 = vld [vmem:[#allocation2 + $0x10] sm:$0xff]
  %v287 = vld [vmem:[#allocation2 + $0x18] sm:$0xff]
  %v288 = vld [vmem:[#allocation2 + $0x20] sm:$0xff]
  %v289 = vld [vmem:[#allocation2 + $0x30] sm:$0xff]
  %v290 = vld [vmem:[#allocation2 + $0x38] sm:$0xff]
  %v291 = vld [vmem:[#allocation2 + $0x40] sm:$0xff]
  %v292 = vld [vmem:[#allocation2 + $0x48] sm:$0xff]
  %v293 = vld [vmem:[#allocation2 + $0x50] sm:$0xff]
  %s294 = scalar_lea.vmem %s1, 2
  %v295 = vld [vmem:[%s294] ss:$8 sm:$0xf]
  %v297 = vlaneseq
  %v298 = vshrl.u32 %v297, 7
  %v299 = vsub.s32 0, %v298
  %v300 = vrot.slane %v295, %v299
  %v301 = vlaneseq
  %v302 = vshrl.u32 %v301, 7
  %v303 = vsub.s32 1, %v302
  %v304 = vrot.slane %v295, %v303
  %v305 = vlaneseq
  %v306 = vshrl.u32 %v305, 7
  %v307 = vsub.s32 2, %v306
  %v308 = vrot.slane %v295, %v307
  %v309 = vlaneseq
  %v310 = vshrl.u32 %v309, 7
  %v311 = vsub.s32 3, %v310
  %v312 = vrot.slane %v295, %v311
  %313 = vrot.lane.b32.xlu0 %v300, 113
  %v314 = vpop.permute.xlu0 %313
  %315 = vrot.lane.b32.xlu0 %v304, 113
  %v316 = vpop.permute.xlu0 %315
  %317 = vrot.lane.b32.xlu0 %v308, 113
  %v318 = vpop.permute.xlu0 %317
  %319 = vrot.lane.b32.xlu0 %v312, 113
  %v320 = vpop.permute.xlu0 %319
  %vm321 = vcmask 924672
  %v322 = vsel %vm321, %v314, %v316
  %v323 = vsel %vm321, %v316, %v318
  %v324 = vsel %vm321, %v318, %v320
  %v330 = vmul.f32 %v284, %v314
  %v331 = vmul.f32 %v285, %v322
  %v332 = vmul.f32 %v286, %v323
  %v333 = vmul.f32 %v287, %v324
  %v334 = vmul.f32 %v288, %v320
  %v335 = vmul.f32 %v289, %v314
  %v336 = vmul.f32 %v290, %v322
  %v337 = vmul.f32 %v291, %v323
  %v338 = vmul.f32 %v292, %v324
  %v339 = vmul.f32 %v293, %v320
  %v340 = vpack.c.bf16 %v335, %v330
  %v341 = vpack.c.bf16 %v336, %v331
  %v342 = vpack.c.bf16 %v337, %v332
  %v343 = vpack.c.bf16 %v338, %v333
  %v344 = vpack.c.bf16 %v339, %v334
  %v350 = vunpack.c.l.b16 %v340
  %v351 = vunpack.c.l.b16 %v341
  %v352 = vunpack.c.l.b16 %v342
  %v353 = vunpack.c.l.b16 %v343
  %v354 = vunpack.c.l.b16 %v344
  %v355 = vunpack.c.h.b16 %v340
  %v356 = vunpack.c.h.b16 %v341
  %v357 = vunpack.c.h.b16 %v342
  %v358 = vunpack.c.h.b16 %v343
  %v359 = vunpack.c.h.b16 %v344
  %v360 = vpack.c.b16 %v351, %v350
  %v361 = vpack.c.b16 %v353, %v352
  %v362 = vpack.c.b16 %v354, %v354
  %v363 = vpack.c.b16 %v356, %v355
  %v364 = vpack.c.b16 %v358, %v357
  %v365 = vpack.c.b16 %v359, %v359
  %366 = vrot.lane.b32.xlu0 %v360, 15
  %v367 = vpop.permute.xlu0 %366
  %368 = vrot.lane.b32.xlu0 %v361, 15
  %v369 = vpop.permute.xlu0 %368
  %370 = vrot.lane.b32.xlu0 %v362, 15
  %v371 = vpop.permute.xlu0 %370
  %372 = vrot.lane.b32.xlu0 %v363, 15
  %v373 = vpop.permute.xlu0 %372
  %374 = vrot.lane.b32.xlu0 %v364, 15
  %v375 = vpop.permute.xlu0 %374
  %376 = vrot.lane.b32.xlu0 %v365, 15
  %v377 = vpop.permute.xlu0 %376
  %v378 = vrot.slane %v367, 4
  %v379 = vrot.slane %v369, 4
  %v380 = vrot.slane %v371, 4
  %v381 = vrot.slane %v373, 4
  %v382 = vrot.slane %v375, 4
  %v383 = vrot.slane %v377, 4
  %v384 = vsel %vm149, %v378, %v379
  %vm385 = vcmask 121856
  %v386 = vsel %vm385, %v367, %v384
  %v387 = vsel %vm149, %v379, %v380
  %v388 = vsel %vm385, %v369, %v387
  %v389 = vsel %vm149, %v381, %v382
  %v390 = vsel %vm385, %v373, %v389
  %v391 = vsel %vm149, %v382, %v383
  %v392 = vsel %vm385, %v375, %v391
  %397 = vst [vmem:[#allocation3 + $0x40] sm:$0xff] %v386
  %398 = vst [vmem:[#allocation3 + $0x48] sm:$0xff] %v388
  %399 = vst [vmem:[#allocation3 + $0x50] sm:$0xff] %v390
  %400 = vst [vmem:[#allocation3 + $0x58] sm:$0xff] %v392
  %v401 = vld [vmem:[#allocation2] sm:$0xff]
  %v402 = vld [vmem:[#allocation2 + $0x8] sm:$0xff]
  %v403 = vld [vmem:[#allocation2 + $0x10] sm:$0xff]
  %v404 = vld [vmem:[#allocation2 + $0x18] sm:$0xff]
  %v405 = vld [vmem:[#allocation2 + $0x20] sm:$0xff]
  %v406 = vld [vmem:[#allocation2 + $0x30] sm:$0xff]
  %v407 = vld [vmem:[#allocation2 + $0x38] sm:$0xff]
  %v408 = vld [vmem:[#allocation2 + $0x40] sm:$0xff]
  %v409 = vld [vmem:[#allocation2 + $0x48] sm:$0xff]
  %v410 = vld [vmem:[#allocation2 + $0x50] sm:$0xff]
  %s411 = scalar_lea.vmem %s1, 3
  %v412 = vld [vmem:[%s411] ss:$8 sm:$0xf]
  %v414 = vlaneseq
  %v415 = vshrl.u32 %v414, 7
  %v416 = vsub.s32 0, %v415
  %v417 = vrot.slane %v412, %v416
  %v418 = vlaneseq
  %v419 = vshrl.u32 %v418, 7
  %v420 = vsub.s32 1, %v419
  %v421 = vrot.slane %v412, %v420
  %v422 = vlaneseq
  %v423 = vshrl.u32 %v422, 7
  %v424 = vsub.s32 2, %v423
  %v425 = vrot.slane %v412, %v424
  %v426 = vlaneseq
  %v427 = vshrl.u32 %v426, 7
  %v428 = vsub.s32 3, %v427
  %v429 = vrot.slane %v412, %v428
  %430 = vrot.lane.b32.xlu0 %v417, 127
  %v431 = vpop.permute.xlu0 %430
  %432 = vrot.lane.b32.xlu0 %v421, 127
  %v433 = vpop.permute.xlu0 %432
  %434 = vrot.lane.b32.xlu0 %v425, 127
  %v435 = vpop.permute.xlu0 %434
  %436 = vrot.lane.b32.xlu0 %v429, 127
  %v437 = vpop.permute.xlu0 %436
  %vm438 = vcmask 1039360
  %v439 = vsel %vm438, %v431, %v433
  %v440 = vsel %vm438, %v433, %v435
  %v441 = vsel %vm438, %v435, %v437
  %v447 = vmul.f32 %v401, %v431
  %v448 = vmul.f32 %v402, %v439
  %v449 = vmul.f32 %v403, %v440
  %v450 = vmul.f32 %v404, %v441
  %v451 = vmul.f32 %v405, %v437
  %v452 = vmul.f32 %v406, %v431
  %v453 = vmul.f32 %v407, %v439
  %v454 = vmul.f32 %v408, %v440
  %v455 = vmul.f32 %v409, %v441
  %v456 = vmul.f32 %v410, %v437
  %v457 = vpack.c.bf16 %v452, %v447
  %v458 = vpack.c.bf16 %v453, %v448
  %v459 = vpack.c.bf16 %v454, %v449
  %v460 = vpack.c.bf16 %v455, %v450
  %v461 = vpack.c.bf16 %v456, %v451
  %v467 = vunpack.c.l.b16 %v457
  %v468 = vunpack.c.l.b16 %v458
  %v469 = vunpack.c.l.b16 %v459
  %v470 = vunpack.c.l.b16 %v460
  %v471 = vunpack.c.l.b16 %v461
  %v472 = vunpack.c.h.b16 %v457
  %v473 = vunpack.c.h.b16 %v458
  %v474 = vunpack.c.h.b16 %v459
  %v475 = vunpack.c.h.b16 %v460
  %v476 = vunpack.c.h.b16 %v461
  %v477 = vpack.c.b16 %v468, %v467
  %v478 = vpack.c.b16 %v470, %v469
  %v479 = vpack.c.b16 %v471, %v471
  %v480 = vpack.c.b16 %v473, %v472
  %v481 = vpack.c.b16 %v475, %v474
  %v482 = vpack.c.b16 %v476, %v476
  %483 = vrot.lane.b32.xlu0 %v477, 1
  %v484 = vpop.permute.xlu0 %483
  %485 = vrot.lane.b32.xlu0 %v478, 1
  %v486 = vpop.permute.xlu0 %485
  %487 = vrot.lane.b32.xlu0 %v479, 1
  %v488 = vpop.permute.xlu0 %487
  %489 = vrot.lane.b32.xlu0 %v480, 1
  %v490 = vpop.permute.xlu0 %489
  %491 = vrot.lane.b32.xlu0 %v481, 1
  %v492 = vpop.permute.xlu0 %491
  %493 = vrot.lane.b32.xlu0 %v482, 1
  %v494 = vpop.permute.xlu0 %493
  %v495 = vrot.slane %v484, 4
  %v496 = vrot.slane %v486, 4
  %v497 = vrot.slane %v488, 4
  %v498 = vrot.slane %v490, 4
  %v499 = vrot.slane %v492, 4
  %v500 = vrot.slane %v494, 4
  %v501 = vsel %vm149, %v495, %v496
  %vm502 = vcmask 7168
  %v503 = vsel %vm502, %v484, %v501
  %v504 = vsel %vm149, %v496, %v497
  %v505 = vsel %vm502, %v486, %v504
  %v506 = vsel %vm149, %v498, %v499
  %v507 = vsel %vm502, %v490, %v506
  %v508 = vsel %vm149, %v499, %v500
  %v509 = vsel %vm502, %v492, %v508
  %514 = vst [vmem:[#allocation3 + $0x60] sm:$0xff] %v503
  %515 = vst [vmem:[#allocation3 + $0x68] sm:$0xff] %v505
  %516 = vst [vmem:[#allocation3 + $0x70] sm:$0xff] %v507
  %517 = vst [vmem:[#allocation3 + $0x78] sm:$0xff] %v509
  %v518 = vld [vmem:[#allocation2 + $0x8] sm:$0xff]
  %v519 = vld [vmem:[#allocation2 + $0x10] sm:$0xff]
  %v520 = vld [vmem:[#allocation2 + $0x18] sm:$0xff]
  %v521 = vld [vmem:[#allocation2 + $0x20] sm:$0xff]
  %v522 = vld [vmem:[#allocation2 + $0x38] sm:$0xff]
  %v523 = vld [vmem:[#allocation2 + $0x40] sm:$0xff]
  %v524 = vld [vmem:[#allocation2 + $0x48] sm:$0xff]
  %v525 = vld [vmem:[#allocation2 + $0x50] sm:$0xff]
  %v526 = vpack.c.bf16 %v522, %v518
  %v527 = vpack.c.bf16 %v523, %v519
  %v528 = vpack.c.bf16 %v524, %v520
  %v529 = vpack.c.bf16 %v525, %v521
  %v534 = vunpack.c.l.b16 %v526
  %v535 = vunpack.c.l.b16 %v527
  %v536 = vunpack.c.l.b16 %v528
  %v537 = vunpack.c.l.b16 %v529
  %v538 = vunpack.c.h.b16 %v526
  %v539 = vunpack.c.h.b16 %v527
  %v540 = vunpack.c.h.b16 %v528
  %v541 = vunpack.c.h.b16 %v529
  %v542 = vpack.c.b16 %v535, %v534
  %v543 = vpack.c.b16 %v537, %v536
  %v544 = vpack.c.b16 %v539, %v538
  %v545 = vpack.c.b16 %v541, %v540
  %550 = vst [vmem:[#allocation3 + $0x80] sm:$0xff] %v542
  %551 = vst [vmem:[#allocation3 + $0x88] sm:$0xff] %v543
  %552 = vst [vmem:[#allocation3 + $0x90] sm:$0xff] %v544
  %553 = vst [vmem:[#allocation3 + $0x98] sm:$0xff] %v545
  %v554 = vld [vmem:[#allocation2 + $0x8] sm:$0xff]
  %v555 = vld [vmem:[#allocation2 + $0x10] sm:$0xff]
  %v556 = vld [vmem:[#allocation2 + $0x18] sm:$0xff]
  %v557 = vld [vmem:[#allocation2 + $0x20] sm:$0xff]
  %v558 = vld [vmem:[#allocation2 + $0x28] sm:$0xff]
  %v559 = vld [vmem:[#allocation2 + $0x38] sm:$0xff]
  %v560 = vld [vmem:[#allocation2 + $0x40] sm:$0xff]
  %v561 = vld [vmem:[#allocation2 + $0x48] sm:$0xff]
  %v562 = vld [vmem:[#allocation2 + $0x50] sm:$0xff]
  %v563 = vld [vmem:[#allocation2 + $0x58] sm:$0xff]
  %s564 = scalar_lea.vmem %s1, 5
  %v565 = vld [vmem:[%s564] ss:$8 sm:$0xf]
  %v567 = vlaneseq
  %v568 = vshrl.u32 %v567, 7
  %v569 = vsub.s32 0, %v568
  %v570 = vrot.slane %v565, %v569
  %v571 = vlaneseq
  %v572 = vshrl.u32 %v571, 7
  %v573 = vsub.s32 1, %v572
  %v574 = vrot.slane %v565, %v573
  %v575 = vlaneseq
  %v576 = vshrl.u32 %v575, 7
  %v577 = vsub.s32 2, %v576
  %v578 = vrot.slane %v565, %v577
  %v579 = vlaneseq
  %v580 = vshrl.u32 %v579, 7
  %v581 = vsub.s32 3, %v580
  %v582 = vrot.slane %v565, %v581
  %583 = vrot.lane.b32.xlu0 %v570, 1
  %v584 = vpop.permute.xlu0 %583
  %585 = vrot.lane.b32.xlu0 %v574, 1
  %v586 = vpop.permute.xlu0 %585
  %587 = vrot.lane.b32.xlu0 %v578, 1
  %v588 = vpop.permute.xlu0 %587
  %589 = vrot.lane.b32.xlu0 %v582, 1
  %v590 = vpop.permute.xlu0 %589
  %vm591 = vcmask 7168
  %v592 = vsel %vm591, %v584, %v586
  %v593 = vsel %vm591, %v586, %v588
  %v594 = vsel %vm591, %v588, %v590
  %v600 = vmul.f32 %v554, %v584
  %v601 = vmul.f32 %v555, %v592
  %v602 = vmul.f32 %v556, %v593
  %v603 = vmul.f32 %v557, %v594
  %v604 = vmul.f32 %v558, %v590
  %v605 = vmul.f32 %v559, %v584
  %v606 = vmul.f32 %v560, %v592
  %v607 = vmul.f32 %v561, %v593
  %v608 = vmul.f32 %v562, %v594
  %v609 = vmul.f32 %v563, %v590
  %v610 = vpack.c.bf16 %v605, %v600
  %v611 = vpack.c.bf16 %v606, %v601
  %v612 = vpack.c.bf16 %v607, %v602
  %v613 = vpack.c.bf16 %v608, %v603
  %v614 = vpack.c.bf16 %v609, %v604
  %v620 = vunpack.c.l.b16 %v610
  %v621 = vunpack.c.l.b16 %v611
  %v622 = vunpack.c.l.b16 %v612
  %v623 = vunpack.c.l.b16 %v613
  %v624 = vunpack.c.l.b16 %v614
  %v625 = vunpack.c.h.b16 %v610
  %v626 = vunpack.c.h.b16 %v611
  %v627 = vunpack.c.h.b16 %v612
  %v628 = vunpack.c.h.b16 %v613
  %v629 = vunpack.c.h.b16 %v614
  %v630 = vpack.c.b16 %v621, %v620
  %v631 = vpack.c.b16 %v623, %v622
  %v632 = vpack.c.b16 %v624, %v624
  %v633 = vpack.c.b16 %v626, %v625
  %v634 = vpack.c.b16 %v628, %v627
  %v635 = vpack.c.b16 %v629, %v629
  %636 = vrot.lane.b32.xlu0 %v630, 127
  %v637 = vpop.permute.xlu0 %636
  %638 = vrot.lane.b32.xlu0 %v631, 127
  %v639 = vpop.permute.xlu0 %638
  %640 = vrot.lane.b32.xlu0 %v632, 127
  %v641 = vpop.permute.xlu0 %640
  %642 = vrot.lane.b32.xlu0 %v633, 127
  %v643 = vpop.permute.xlu0 %642
  %644 = vrot.lane.b32.xlu0 %v634, 127
  %v645 = vpop.permute.xlu0 %644
  %646 = vrot.lane.b32.xlu0 %v635, 127
  %v647 = vpop.permute.xlu0 %646
  %v648 = vrot.slane %v637, 4
  %v649 = vrot.slane %v639, 4
  %v650 = vrot.slane %v641, 4
  %v651 = vrot.slane %v643, 4
  %v652 = vrot.slane %v645, 4
  %v653 = vrot.slane %v647, 4
  %v654 = vsel %vm149, %v648, %v649
  %vm655 = vcmask 1039360
  %v656 = vsel %vm655, %v637, %v654
  %v657 = vsel %vm149, %v649, %v650
  %v658 = vsel %vm655, %v639, %v657
  %v659 = vsel %vm149, %v651, %v652
  %v660 = vsel %vm655, %v643, %v659
  %v661 = vsel %vm149, %v652, %v653
  %v662 = vsel %vm655, %v645, %v661
  %667 = vst [vmem:[#allocation3 + $0xa0] sm:$0xff] %v656
  %668 = vst [vmem:[#allocation3 + $0xa8] sm:$0xff] %v658
  %669 = vst [vmem:[#allocation3 + $0xb0] sm:$0xff] %v660
  %670 = vst [vmem:[#allocation3 + $0xb8] sm:$0xff] %v662
  %v671 = vld [vmem:[#allocation2 + $0x8] sm:$0xff]
  %v672 = vld [vmem:[#allocation2 + $0x10] sm:$0xff]
  %v673 = vld [vmem:[#allocation2 + $0x18] sm:$0xff]
  %v674 = vld [vmem:[#allocation2 + $0x20] sm:$0xff]
  %v675 = vld [vmem:[#allocation2 + $0x28] sm:$0xff]
  %v676 = vld [vmem:[#allocation2 + $0x38] sm:$0xff]
  %v677 = vld [vmem:[#allocation2 + $0x40] sm:$0xff]
  %v678 = vld [vmem:[#allocation2 + $0x48] sm:$0xff]
  %v679 = vld [vmem:[#allocation2 + $0x50] sm:$0xff]
  %v680 = vld [vmem:[#allocation2 + $0x58] sm:$0xff]
  %s681 = scalar_lea.vmem %s1, 6
  %v682 = vld [vmem:[%s681] ss:$8 sm:$0xf]
  %v684 = vlaneseq
  %v685 = vshrl.u32 %v684, 7
  %v686 = vsub.s32 0, %v685
  %v687 = vrot.slane %v682, %v686
  %v688 = vlaneseq
  %v689 = vshrl.u32 %v688, 7
  %v690 = vsub.s32 1, %v689
  %v691 = vrot.slane %v682, %v690
  %v692 = vlaneseq
  %v693 = vshrl.u32 %v692, 7
  %v694 = vsub.s32 2, %v693
  %v695 = vrot.slane %v682, %v694
  %v696 = vlaneseq
  %v697 = vshrl.u32 %v696, 7
  %v698 = vsub.s32 3, %v697
  %v699 = vrot.slane %v682, %v698
  %700 = vrot.lane.b32.xlu0 %v687, 15
  %v701 = vpop.permute.xlu0 %700
  %702 = vrot.lane.b32.xlu0 %v691, 15
  %v703 = vpop.permute.xlu0 %702
  %704 = vrot.lane.b32.xlu0 %v695, 15
  %v705 = vpop.permute.xlu0 %704
  %706 = vrot.lane.b32.xlu0 %v699, 15
  %v707 = vpop.permute.xlu0 %706
  %vm708 = vcmask 121856
  %v709 = vsel %vm708, %v701, %v703
  %v710 = vsel %vm708, %v703, %v705
  %v711 = vsel %vm708, %v705, %v707
  %v717 = vmul.f32 %v671, %v701
  %v718 = vmul.f32 %v672, %v709
  %v719 = vmul.f32 %v673, %v710
  %v720 = vmul.f32 %v674, %v711
  %v721 = vmul.f32 %v675, %v707
  %v722 = vmul.f32 %v676, %v701
  %v723 = vmul.f32 %v677, %v709
  %v724 = vmul.f32 %v678, %v710
  %v725 = vmul.f32 %v679, %v711
  %v726 = vmul.f32 %v680, %v707
  %v727 = vpack.c.bf16 %v722, %v717
  %v728 = vpack.c.bf16 %v723, %v718
  %v729 = vpack.c.bf16 %v724, %v719
  %v730 = vpack.c.bf16 %v725, %v720
  %v731 = vpack.c.bf16 %v726, %v721
  %v737 = vunpack.c.l.b16 %v727
  %v738 = vunpack.c.l.b16 %v728
  %v739 = vunpack.c.l.b16 %v729
  %v740 = vunpack.c.l.b16 %v730
  %v741 = vunpack.c.l.b16 %v731
  %v742 = vunpack.c.h.b16 %v727
  %v743 = vunpack.c.h.b16 %v728
  %v744 = vunpack.c.h.b16 %v729
  %v745 = vunpack.c.h.b16 %v730
  %v746 = vunpack.c.h.b16 %v731
  %v747 = vpack.c.b16 %v738, %v737
  %v748 = vpack.c.b16 %v740, %v739
  %v749 = vpack.c.b16 %v741, %v741
  %v750 = vpack.c.b16 %v743, %v742
  %v751 = vpack.c.b16 %v745, %v744
  %v752 = vpack.c.b16 %v746, %v746
  %753 = vrot.lane.b32.xlu0 %v747, 113
  %v754 = vpop.permute.xlu0 %753
  %755 = vrot.lane.b32.xlu0 %v748, 113
  %v756 = vpop.permute.xlu0 %755
  %757 = vrot.lane.b32.xlu0 %v749, 113
  %v758 = vpop.permute.xlu0 %757
  %759 = vrot.lane.b32.xlu0 %v750, 113
  %v760 = vpop.permute.xlu0 %759
  %761 = vrot.lane.b32.xlu0 %v751, 113
  %v762 = vpop.permute.xlu0 %761
  %763 = vrot.lane.b32.xlu0 %v752, 113
  %v764 = vpop.permute.xlu0 %763
  %v765 = vrot.slane %v754, 4
  %v766 = vrot.slane %v756, 4
  %v767 = vrot.slane %v758, 4
  %v768 = vrot.slane %v760, 4
  %v769 = vrot.slane %v762, 4
  %v770 = vrot.slane %v764, 4
  %v771 = vsel %vm149, %v765, %v766
  %vm772 = vcmask 924672
  %v773 = vsel %vm772, %v754, %v771
  %v774 = vsel %vm149, %v766, %v767
  %v775 = vsel %vm772, %v756, %v774
  %v776 = vsel %vm149, %v768, %v769
  %v777 = vsel %vm772, %v760, %v776
  %v778 = vsel %vm149, %v769, %v770
  %v779 = vsel %vm772, %v762, %v778
  %784 = vst [vmem:[#allocation3 + $0xc0] sm:$0xff] %v773
  %785 = vst [vmem:[#allocation3 + $0xc8] sm:$0xff] %v775
  %786 = vst [vmem:[#allocation3 + $0xd0] sm:$0xff] %v777
  %787 = vst [vmem:[#allocation3 + $0xd8] sm:$0xff] %v779
  %v788 = vld [vmem:[#allocation2 + $0x8] sm:$0xff]
  %v789 = vld [vmem:[#allocation2 + $0x10] sm:$0xff]
  %v790 = vld [vmem:[#allocation2 + $0x18] sm:$0xff]
  %v791 = vld [vmem:[#allocation2 + $0x20] sm:$0xff]
  %v792 = vld [vmem:[#allocation2 + $0x28] sm:$0xff]
  %v793 = vld [vmem:[#allocation2 + $0x38] sm:$0xff]
  %v794 = vld [vmem:[#allocation2 + $0x40] sm:$0xff]
  %v795 = vld [vmem:[#allocation2 + $0x48] sm:$0xff]
  %v796 = vld [vmem:[#allocation2 + $0x50] sm:$0xff]
  %v797 = vld [vmem:[#allocation2 + $0x58] sm:$0xff]
  %s798 = scalar_lea.vmem %s1, 7
  %v799 = vld [vmem:[%s798] ss:$8 sm:$0xf]
  %v801 = vlaneseq
  %v802 = vshrl.u32 %v801, 7
  %v803 = vsub.s32 0, %v802
  %v804 = vrot.slane %v799, %v803
  %v805 = vlaneseq
  %v806 = vshrl.u32 %v805, 7
  %v807 = vsub.s32 1, %v806
  %v808 = vrot.slane %v799, %v807
  %v809 = vlaneseq
  %v810 = vshrl.u32 %v809, 7
  %v811 = vsub.s32 2, %v810
  %v812 = vrot.slane %v799, %v811
  %v813 = vlaneseq
  %v814 = vshrl.u32 %v813, 7
  %v815 = vsub.s32 3, %v814
  %v816 = vrot.slane %v799, %v815
  %817 = vrot.lane.b32.xlu0 %v804, 16
  %v818 = vpop.permute.xlu0 %817
  %819 = vrot.lane.b32.xlu0 %v808, 16
  %v820 = vpop.permute.xlu0 %819
  %821 = vrot.lane.b32.xlu0 %v812, 16
  %v822 = vpop.permute.xlu0 %821
  %823 = vrot.lane.b32.xlu0 %v816, 16
  %v824 = vpop.permute.xlu0 %823
  %vm825 = vcmask 130048
  %v826 = vsel %vm825, %v818, %v820
  %v827 = vsel %vm825, %v820, %v822
  %v828 = vsel %vm825, %v822, %v824
  %v834 = vmul.f32 %v788, %v818
  %v835 = vmul.f32 %v789, %v826
  %v836 = vmul.f32 %v790, %v827
  %v837 = vmul.f32 %v791, %v828
  %v838 = vmul.f32 %v792, %v824
  %v839 = vmul.f32 %v793, %v818
  %v840 = vmul.f32 %v794, %v826
  %v841 = vmul.f32 %v795, %v827
  %v842 = vmul.f32 %v796, %v828
  %v843 = vmul.f32 %v797, %v824
  %v844 = vpack.c.bf16 %v839, %v834
  %v845 = vpack.c.bf16 %v840, %v835
  %v846 = vpack.c.bf16 %v841, %v836
  %v847 = vpack.c.bf16 %v842, %v837
  %v848 = vpack.c.bf16 %v843, %v838
  %v854 = vunpack.c.l.b16 %v844
  %v855 = vunpack.c.l.b16 %v845
  %v856 = vunpack.c.l.b16 %v846
  %v857 = vunpack.c.l.b16 %v847
  %v858 = vunpack.c.l.b16 %v848
  %v859 = vunpack.c.h.b16 %v844
  %v860 = vunpack.c.h.b16 %v845
  %v861 = vunpack.c.h.b16 %v846
  %v862 = vunpack.c.h.b16 %v847
  %v863 = vunpack.c.h.b16 %v848
  %v864 = vpack.c.b16 %v855, %v854
  %v865 = vpack.c.b16 %v857, %v856
  %v866 = vpack.c.b16 %v858, %v858
  %v867 = vpack.c.b16 %v860, %v859
  %v868 = vpack.c.b16 %v862, %v861
  %v869 = vpack.c.b16 %v863, %v863
  %870 = vrot.lane.b32.xlu0 %v864, 112
  %v871 = vpop.permute.xlu0 %870
  %872 = vrot.lane.b32.xlu0 %v865, 112
  %v873 = vpop.permute.xlu0 %872
  %874 = vrot.lane.b32.xlu0 %v866, 112
  %v875 = vpop.permute.xlu0 %874
  %876 = vrot.lane.b32.xlu0 %v867, 112
  %v877 = vpop.permute.xlu0 %876
  %878 = vrot.lane.b32.xlu0 %v868, 112
  %v879 = vpop.permute.xlu0 %878
  %880 = vrot.lane.b32.xlu0 %v869, 112
  %v881 = vpop.permute.xlu0 %880
  %v882 = vrot.slane %v871, 4
  %v883 = vrot.slane %v873, 4
  %v884 = vrot.slane %v875, 4
  %v885 = vrot.slane %v877, 4
  %v886 = vrot.slane %v879, 4
  %v887 = vrot.slane %v881, 4
  %v888 = vsel %vm149, %v882, %v883
  %vm889 = vcmask 916480
  %v890 = vsel %vm889, %v871, %v888
  %v891 = vsel %vm149, %v883, %v884
  %v892 = vsel %vm889, %v873, %v891
  %v893 = vsel %vm149, %v885, %v886
  %v894 = vsel %vm889, %v877, %v893
  %v895 = vsel %vm149, %v886, %v887
  %v896 = vsel %vm889, %v879, %v895
  %901 = vst [vmem:[#allocation3 + $0xe0] sm:$0xff] %v890
  %902 = vst [vmem:[#allocation3 + $0xe8] sm:$0xff] %v892
  %903 = vst [vmem:[#allocation3 + $0xf0] sm:$0xff] %v894
  %904 = vst [vmem:[#allocation3 + $0xf8] sm:$0xff] %v896
  %v905 = vld [vmem:[#allocation2 + $0x8] sm:$0xff]
  %v906 = vld [vmem:[#allocation2 + $0x10] sm:$0xff]
  %v907 = vld [vmem:[#allocation2 + $0x18] sm:$0xff]
  %v908 = vld [vmem:[#allocation2 + $0x20] sm:$0xff]
  %v909 = vld [vmem:[#allocation2 + $0x28] sm:$0xff]
  %v910 = vld [vmem:[#allocation2 + $0x38] sm:$0xff]
  %v911 = vld [vmem:[#allocation2 + $0x40] sm:$0xff]
  %v912 = vld [vmem:[#allocation2 + $0x48] sm:$0xff]
  %v913 = vld [vmem:[#allocation2 + $0x50] sm:$0xff]
  %v914 = vld [vmem:[#allocation2 + $0x58] sm:$0xff]
  %s915 = scalar_lea.vmem %s1, 32
  %v916 = vld [vmem:[%s915] ss:$8 sm:$0xf]
  %v918 = vlaneseq
  %v919 = vshrl.u32 %v918, 7
  %v920 = vsub.s32 0, %v919
  %v921 = vrot.slane %v916, %v920
  %v922 = vlaneseq
  %v923 = vshrl.u32 %v922, 7
  %v924 = vsub.s32 1, %v923
  %v925 = vrot.slane %v916, %v924
  %v926 = vlaneseq
  %v927 = vshrl.u32 %v926, 7
  %v928 = vsub.s32 2, %v927
  %v929 = vrot.slane %v916, %v928
  %v930 = vlaneseq
  %v931 = vshrl.u32 %v930, 7
  %v932 = vsub.s32 3, %v931
  %v933 = vrot.slane %v916, %v932
  %934 = vrot.lane.b32.xlu0 %v921, 17
  %v935 = vpop.permute.xlu0 %934
  %936 = vrot.lane.b32.xlu0 %v925, 17
  %v937 = vpop.permute.xlu0 %936
  %938 = vrot.lane.b32.xlu0 %v929, 17
  %v939 = vpop.permute.xlu0 %938
  %940 = vrot.lane.b32.xlu0 %v933, 17
  %v941 = vpop.permute.xlu0 %940
  %vm942 = vcmask 138240
  %v943 = vsel %vm942, %v935, %v937
  %v944 = vsel %vm942, %v937, %v939
  %v945 = vsel %vm942, %v939, %v941
  %v951 = vmul.f32 %v905, %v935
  %v952 = vmul.f32 %v906, %v943
  %v953 = vmul.f32 %v907, %v944
  %v954 = vmul.f32 %v908, %v945
  %v955 = vmul.f32 %v909, %v941
  %v956 = vmul.f32 %v910, %v935
  %v957 = vmul.f32 %v911, %v943
  %v958 = vmul.f32 %v912, %v944
  %v959 = vmul.f32 %v913, %v945
  %v960 = vmul.f32 %v914, %v941
  %v961 = vpack.c.bf16 %v956, %v951
  %v962 = vpack.c.bf16 %v957, %v952
  %v963 = vpack.c.bf16 %v958, %v953
  %v964 = vpack.c.bf16 %v959, %v954
  %v965 = vpack.c.bf16 %v960, %v955
  %v971 = vunpack.c.l.b16 %v961
  %v972 = vunpack.c.l.b16 %v962
  %v973 = vunpack.c.l.b16 %v963
  %v974 = vunpack.c.l.b16 %v964
  %v975 = vunpack.c.l.b16 %v965
  %v976 = vunpack.c.h.b16 %v961
  %v977 = vunpack.c.h.b16 %v962
  %v978 = vunpack.c.h.b16 %v963
  %v979 = vunpack.c.h.b16 %v964
  %v980 = vunpack.c.h.b16 %v965
  %v981 = vpack.c.b16 %v972, %v971
  %v982 = vpack.c.b16 %v974, %v973
  %v983 = vpack.c.b16 %v975, %v975
  %v984 = vpack.c.b16 %v977, %v976
  %v985 = vpack.c.b16 %v979, %v978
  %v986 = vpack.c.b16 %v980, %v980
  %987 = vrot.lane.b32.xlu0 %v981, 111
  %v988 = vpop.permute.xlu0 %987
  %989 = vrot.lane.b32.xlu0 %v982, 111
  %v990 = vpop.permute.xlu0 %989
  %991 = vrot.lane.b32.xlu0 %v983, 111
  %v992 = vpop.permute.xlu0 %991
  %993 = vrot.lane.b32.xlu0 %v984, 111
  %v994 = vpop.permute.xlu0 %993
  %995 = vrot.lane.b32.xlu0 %v985, 111
  %v996 = vpop.permute.xlu0 %995
  %997 = vrot.lane.b32.xlu0 %v986, 111
  %v998 = vpop.permute.xlu0 %997
  %v999 = vrot.slane %v988, 4
  %v1000 = vrot.slane %v990, 4
  %v1001 = vrot.slane %v992, 4
  %v1002 = vrot.slane %v994, 4
  %v1003 = vrot.slane %v996, 4
  %v1004 = vrot.slane %v998, 4
  %v1005 = vsel %vm149, %v999, %v1000
  %vm1006 = vcmask 908288
  %v1007 = vsel %vm1006, %v988, %v1005
  %v1008 = vsel %vm149, %v1000, %v1001
  %v1009 = vsel %vm1006, %v990, %v1008
  %v1010 = vsel %vm149, %v1002, %v1003
  %v1011 = vsel %vm1006, %v994, %v1010
  %v1012 = vsel %vm149, %v1003, %v1004
  %v1013 = vsel %vm1006, %v996, %v1012
  %1018 = vst [vmem:[#allocation3 + $0x100] sm:$0xff] %v1007
  %1019 = vst [vmem:[#allocation3 + $0x108] sm:$0xff] %v1009
  %1020 = vst [vmem:[#allocation3 + $0x110] sm:$0xff] %v1011
  %1021 = vst [vmem:[#allocation3 + $0x118] sm:$0xff] %v1013
  %v1022 = vld [vmem:[%s2] sm:$0xff]
  %v1023 = vld [vmem:[#allocation3] sm:$0xff]
  %v1024 = vld [vmem:[#allocation3 + $0x8] sm:$0xff]
  %v1025 = vld [vmem:[#allocation3 + $0x10] sm:$0xff]
  %v1026 = vld [vmem:[#allocation3 + $0x18] sm:$0xff]
  %v1027 = vld [vmem:[#allocation3 + $0x20] sm:$0xff]
  %v1028 = vld [vmem:[#allocation3 + $0x28] sm:$0xff]
  %v1029 = vld [vmem:[#allocation3 + $0x30] sm:$0xff]
  %v1030 = vld [vmem:[#allocation3 + $0x38] sm:$0xff]
  %v1031 = vld [vmem:[#allocation3 + $0x40] sm:$0xff]
  %v1032 = vld [vmem:[#allocation3 + $0x48] sm:$0xff]
  %v1033 = vld [vmem:[#allocation3 + $0x50] sm:$0xff]
  %v1034 = vld [vmem:[#allocation3 + $0x58] sm:$0xff]
  %v1035 = vld [vmem:[#allocation3 + $0x60] sm:$0xff]
  %v1036 = vld [vmem:[#allocation3 + $0x68] sm:$0xff]
  %v1037 = vld [vmem:[#allocation3 + $0x70] sm:$0xff]
  %v1038 = vld [vmem:[#allocation3 + $0x78] sm:$0xff]
  %v1039 = vld [vmem:[#allocation3 + $0x80] sm:$0xff]
  %v1040 = vld [vmem:[#allocation3 + $0x88] sm:$0xff]
  %v1041 = vld [vmem:[#allocation3 + $0x90] sm:$0xff]
  %v1042 = vld [vmem:[#allocation3 + $0x98] sm:$0xff]
  %v1043 = vld [vmem:[#allocation3 + $0xa0] sm:$0xff]
  %v1044 = vld [vmem:[#allocation3 + $0xa8] sm:$0xff]
  %v1045 = vld [vmem:[#allocation3 + $0xb0] sm:$0xff]
  %v1046 = vld [vmem:[#allocation3 + $0xb8] sm:$0xff]
  %v1047 = vld [vmem:[#allocation3 + $0xc0] sm:$0xff]
  %v1048 = vld [vmem:[#allocation3 + $0xc8] sm:$0xff]
  %v1049 = vld [vmem:[#allocation3 + $0xd0] sm:$0xff]
  %v1050 = vld [vmem:[#allocation3 + $0xd8] sm:$0xff]
  %v1051 = vld [vmem:[#allocation3 + $0xe0] sm:$0xff]
  %v1052 = vld [vmem:[#allocation3 + $0xe8] sm:$0xff]
  %v1053 = vld [vmem:[#allocation3 + $0xf0] sm:$0xff]
  %v1054 = vld [vmem:[#allocation3 + $0xf8] sm:$0xff]
  %v1055 = vld [vmem:[#allocation3 + $0x100] sm:$0xff]
  %v1056 = vld [vmem:[#allocation3 + $0x108] sm:$0xff]
  %v1057 = vld [vmem:[#allocation3 + $0x110] sm:$0xff]
  %v1058 = vld [vmem:[#allocation3 + $0x118] sm:$0xff]
  %v1060 = vunpack.c.l.b16 %v1022
  %v1061 = vunpack.c.h.b16 %v1022
  %v1062 = vpack.c.b16 %v1060, %v1060
  %v1063 = vpack.c.b16 %v1061, %v1061
  %v1101 = vunpack.c.l.b16 %v1023
  %v1102 = vunpack.c.h.b16 %v1023
  %v1103 = vunpack.c.l.b16 %v1024
  %v1104 = vunpack.c.h.b16 %v1024
  %v1105 = vunpack.c.l.b16 %v1025
  %v1106 = vunpack.c.h.b16 %v1025
  %v1107 = vunpack.c.l.b16 %v1026
  %v1108 = vunpack.c.h.b16 %v1026
  %v1109 = vunpack.c.l.b16 %v1027
  %v1110 = vunpack.c.h.b16 %v1027
  %v1111 = vunpack.c.l.b16 %v1028
  %v1112 = vunpack.c.h.b16 %v1028
  %v1113 = vunpack.c.l.b16 %v1029
  %v1114 = vunpack.c.h.b16 %v1029
  %v1115 = vunpack.c.l.b16 %v1030
  %v1116 = vunpack.c.h.b16 %v1030
  %v1117 = vunpack.c.l.b16 %v1031
  %v1118 = vunpack.c.h.b16 %v1031
  %v1119 = vunpack.c.l.b16 %v1032
  %v1120 = vunpack.c.h.b16 %v1032
  %v1121 = vunpack.c.l.b16 %v1033
  %v1122 = vunpack.c.h.b16 %v1033
  %v1123 = vunpack.c.l.b16 %v1034
  %v1124 = vunpack.c.h.b16 %v1034
  %v1125 = vunpack.c.l.b16 %v1035
  %v1126 = vunpack.c.h.b16 %v1035
  %v1127 = vunpack.c.l.b16 %v1036
  %v1128 = vunpack.c.h.b16 %v1036
  %v1129 = vunpack.c.l.b16 %v1037
  %v1130 = vunpack.c.h.b16 %v1037
  %v1131 = vunpack.c.l.b16 %v1038
  %v1132 = vunpack.c.h.b16 %v1038
  %v1133 = vunpack.c.l.b16 %v1039
  %v1134 = vunpack.c.h.b16 %v1039
  %v1135 = vunpack.c.l.b16 %v1040
  %v1136 = vunpack.c.h.b16 %v1040
  %v1137 = vunpack.c.l.b16 %v1041
  %v1138 = vunpack.c.h.b16 %v1041
  %v1139 = vunpack.c.l.b16 %v1042
  %v1140 = vunpack.c.h.b16 %v1042
  %v1141 = vunpack.c.l.b16 %v1043
  %v1142 = vunpack.c.h.b16 %v1043
  %v1143 = vunpack.c.l.b16 %v1044
  %v1144 = vunpack.c.h.b16 %v1044
  %v1145 = vunpack.c.l.b16 %v1045
  %v1146 = vunpack.c.h.b16 %v1045
  %v1147 = vunpack.c.l.b16 %v1046
  %v1148 = vunpack.c.h.b16 %v1046
  %v1149 = vunpack.c.l.b16 %v1047
  %v1150 = vunpack.c.h.b16 %v1047
  %v1151 = vunpack.c.l.b16 %v1048
  %v1152 = vunpack.c.h.b16 %v1048
  %v1153 = vunpack.c.l.b16 %v1049
  %v1154 = vunpack.c.h.b16 %v1049
  %v1155 = vunpack.c.l.b16 %v1050
  %v1156 = vunpack.c.h.b16 %v1050
  %v1157 = vunpack.c.l.b16 %v1051
  %v1158 = vunpack.c.h.b16 %v1051
  %v1159 = vunpack.c.l.b16 %v1052
  %v1160 = vunpack.c.h.b16 %v1052
  %v1161 = vunpack.c.l.b16 %v1053
  %v1162 = vunpack.c.h.b16 %v1053
  %v1163 = vunpack.c.l.b16 %v1054
  %v1164 = vunpack.c.h.b16 %v1054
  %v1165 = vunpack.c.l.b16 %v1055
  %v1166 = vunpack.c.h.b16 %v1055
  %v1167 = vunpack.c.l.b16 %v1056
  %v1168 = vunpack.c.h.b16 %v1056
  %v1169 = vunpack.c.l.b16 %v1057
  %v1170 = vunpack.c.h.b16 %v1057
  %v1171 = vunpack.c.l.b16 %v1058
  %v1172 = vunpack.c.h.b16 %v1058
  %v1173 = vpack.c.b16 %v1105, %v1101
  %v1174 = vpack.c.b16 %v1106, %v1102
  %v1175 = vpack.c.b16 %v1107, %v1103
  %v1176 = vpack.c.b16 %v1108, %v1104
  %v1177 = vpack.c.b16 %v1113, %v1109
  %v1178 = vpack.c.b16 %v1114, %v1110
  %v1179 = vpack.c.b16 %v1115, %v1111
  %v1180 = vpack.c.b16 %v1116, %v1112
  %v1181 = vpack.c.b16 %v1121, %v1117
  %v1182 = vpack.c.b16 %v1122, %v1118
  %v1183 = vpack.c.b16 %v1123, %v1119
  %v1184 = vpack.c.b16 %v1124, %v1120
  %v1185 = vpack.c.b16 %v1129, %v1125
  %v1186 = vpack.c.b16 %v1130, %v1126
  %v1187 = vpack.c.b16 %v1131, %v1127
  %v1188 = vpack.c.b16 %v1132, %v1128
  %v1189 = vpack.c.b16 %v1137, %v1133
  %v1190 = vpack.c.b16 %v1138, %v1134
  %v1191 = vpack.c.b16 %v1139, %v1135
  %v1192 = vpack.c.b16 %v1140, %v1136
  %v1193 = vpack.c.b16 %v1145, %v1141
  %v1194 = vpack.c.b16 %v1146, %v1142
  %v1195 = vpack.c.b16 %v1147, %v1143
  %v1196 = vpack.c.b16 %v1148, %v1144
  %v1197 = vpack.c.b16 %v1153, %v1149
  %v1198 = vpack.c.b16 %v1154, %v1150
  %v1199 = vpack.c.b16 %v1155, %v1151
  %v1200 = vpack.c.b16 %v1156, %v1152
  %v1201 = vpack.c.b16 %v1161, %v1157
  %v1202 = vpack.c.b16 %v1162, %v1158
  %v1203 = vpack.c.b16 %v1163, %v1159
  %v1204 = vpack.c.b16 %v1164, %v1160
  %v1205 = vpack.c.b16 %v1169, %v1165
  %v1206 = vpack.c.b16 %v1170, %v1166
  %v1207 = vpack.c.b16 %v1171, %v1167
  %v1208 = vpack.c.b16 %v1172, %v1168
  %v1246 = vsel %vm825, %v1063, 0
  %1248 = vmatprep.subr.bf16.mxu0 %v1202
  %1249 = vmatpush1.bf16.msra.mxu0 %v1201
  %1250 = vmatprep.subr.bf16.mxu0 %v1198
  %1251 = vmatpush1.bf16.msra.mxu0 %v1197
  %1252 = vmatprep.subr.bf16.mxu0 %v1194
  %1253 = vmatpush1.bf16.msra.mxu0 %v1193
  %1254 = vmatprep.subr.bf16.mxu0 %v1190
  %1255 = vmatpush1.bf16.msra.mxu0 %v1189
  %1256 = vmatprep.subr.bf16.mxu0 %v1186
  %1257 = vmatpush1.bf16.msra.mxu0 %v1185
  %1258 = vmatprep.subr.bf16.mxu0 %v1182
  %1259 = vmatpush1.bf16.msra.mxu0 %v1181
  %1260 = vmatprep.subr.bf16.mxu0 %v1178
  %1261 = vmatpush1.bf16.msra.mxu0 %v1177
  %1262 = vmatprep.subr.bf16.mxu0 %v1174
  %1263 = vmatpush1.bf16.msra.mxu0 %v1173
  %1264 = vmatprep.subr.bf16.mxu0 0
  %1265 = vmatpush2.bf16.msra.mxu0 0
  %1266 = vmatprep.subr.bf16.mxu0 0
  %1267 = vmatpush2.bf16.msra.mxu0 0
  %1268 = vmatprep.subr.bf16.mxu0 0
  %1269 = vmatpush2.bf16.msra.mxu0 0
  %1270 = vmatprep.subr.bf16.mxu0 0
  %1271 = vmatpush2.bf16.msra.mxu0 0
  %1272 = vmatprep.subr.bf16.mxu0 0
  %1273 = vmatpush2.bf16.msra.mxu0 0
  %1274 = vmatprep.subr.bf16.mxu0 0
  %1275 = vmatpush2.bf16.msra.mxu0 0
  %1276 = vmatprep.subr.bf16.mxu0 0
  %1277 = vmatpush2.bf16.msra.mxu0 0
  %1278 = vmatprep.subr.bf16.mxu0 %v1206
  %1279 = vmatpush2.bf16.msra.mxu0 %v1205
  %1280 = vmatprep.mubr.bf16.mxu0 %v1246
  %1281 = vmatmul.mubr.bf16.gmra.mxu0 %v1062
  %v1282 = vpop.f32.mrf.mxu0
  %v1283 = vadd.f32 0.0, %v1282
  %v1284 = vpop.f32.mrf.mxu0
  %v1285 = vadd.f32 0.0, %v1284
  %v1286 = vpop.f32.mrf.mxu0
  %v1287 = vpop.f32.mrf.mxu0
  %1288 = vdwg.mxu0
  %1289 = vmatprep.subr.bf16.mxu0 %v1204
  %1290 = vmatpush1.bf16.msra.mxu0 %v1203
  %1291 = vmatprep.subr.bf16.mxu0 %v1200
  %1292 = vmatpush1.bf16.msra.mxu0 %v1199
  %1293 = vmatprep.subr.bf16.mxu0 %v1196
  %1294 = vmatpush1.bf16.msra.mxu0 %v1195
  %1295 = vmatprep.subr.bf16.mxu0 %v1192
  %1296 = vmatpush1.bf16.msra.mxu0 %v1191
  %1297 = vmatprep.subr.bf16.mxu0 %v1188
  %1298 = vmatpush1.bf16.msra.mxu0 %v1187
  %1299 = vmatprep.subr.bf16.mxu0 %v1184
  %1300 = vmatpush1.bf16.msra.mxu0 %v1183
  %1301 = vmatprep.subr.bf16.mxu0 %v1180
  %1302 = vmatpush1.bf16.msra.mxu0 %v1179
  %1303 = vmatprep.subr.bf16.mxu0 %v1176
  %1304 = vmatpush1.bf16.msra.mxu0 %v1175
  %1305 = vmatprep.subr.bf16.mxu0 0
  %1306 = vmatpush2.bf16.msra.mxu0 0
  %1307 = vmatprep.subr.bf16.mxu0 0
  %1308 = vmatpush2.bf16.msra.mxu0 0
  %1309 = vmatprep.subr.bf16.mxu0 0
  %1310 = vmatpush2.bf16.msra.mxu0 0
  %1311 = vmatprep.subr.bf16.mxu0 0
  %1312 = vmatpush2.bf16.msra.mxu0 0
  %1313 = vmatprep.subr.bf16.mxu0 0
  %1314 = vmatpush2.bf16.msra.mxu0 0
  %1315 = vmatprep.subr.bf16.mxu0 0
  %1316 = vmatpush2.bf16.msra.mxu0 0
  %1317 = vmatprep.subr.bf16.mxu0 0
  %1318 = vmatpush2.bf16.msra.mxu0 0
  %1319 = vmatprep.subr.bf16.mxu0 %v1208
  %1320 = vmatpush2.bf16.msra.mxu0 %v1207
  %1321 = vmatprep.mubr.bf16.mxu0 %v1246
  %1322 = vmatmul.mubr.bf16.gmra.mxu0 %v1062
  %v1323 = vpop.f32.mrf.mxu0
  %v1324 = vadd.f32 0.0, %v1323
  %v1325 = vpop.f32.mrf.mxu0
  %v1326 = vadd.f32 0.0, %v1325
  %v1327 = vpop.f32.mrf.mxu0
  %v1328 = vpop.f32.mrf.mxu0
  %1329 = vdwg.mxu0
  %v1330 = vadd.f32 %v1283, %v1285
  %v1331 = vadd.f32 %v1330, %v1324
  %v1332 = vadd.f32 %v1331, %v1326
  %1333 = vadd.xlane.f32.xlu0 %v1332
  %v1334 = vpop.xlane.xlu0 %1333
  %v1335 = vmul.f32 %v1283, %v1283
  %v1336 = vmul.f32 %v1285, %v1285
  %v1337 = vmul.f32 %v1324, %v1324
  %v1338 = vmul.f32 %v1326, %v1326
  %v1339 = vadd.f32 %v1335, %v1336
  %v1340 = vadd.f32 %v1339, %v1337
  %v1341 = vadd.f32 %v1340, %v1338
  %1342 = vadd.xlane.f32.xlu0 %v1341
  %v1343 = vpop.xlane.xlu0 %1342
  %v1344 = vmul.f32 %v1334, 0.001953125
  %v1345 = vmul.f32 %v1343, 0.001953125
  %v1346 = vmul.f32 %v1344, %v1344
  %v1347 = vsub.f32 %v1345, %v1346
  %v1348 = vld [vmem:[%s3] sm:$0xff]
  %v1349 = vadd.f32 %v1347, 1e-05
  %v1350 = vrsqrt.pop %v1349
  %v1351 = vmul.f32 %v1348, %v1350
  %v1352 = vld [vmem:[%s4] sm:$0xff]
  %v1353 = vmul.f32 %v1344, %v1351
  %v1354 = vsub.f32 %v1352, %v1353
  %1356 = vset.pattern.permute.xlu0 0
  %1357 = vperm.xlu0 %1356, %v1351
  %v1358 = vpop.permute.xlu0 %1357
  %v1360 = vmul.f32 %v1283, %v1358
  %v1361 = vmul.f32 %v1285, %v1358
  %v1362 = vmul.f32 %v1324, %v1358
  %v1363 = vmul.f32 %v1326, %v1358
  %1365 = vset.pattern.permute.xlu0 0
  %1366 = vperm.xlu0 %1365, %v1354
  %v1367 = vpop.permute.xlu0 %1366
  %v1369 = vadd.f32 %v1360, %v1367
  %v1370 = vadd.f32 %v1361, %v1367
  %v1371 = vadd.f32 %v1362, %v1367
  %v1372 = vadd.f32 %v1363, %v1367
  %v1373 = vmax.f32 %v1369, 0.0
  %v1374 = vmax.f32 %v1370, 0.0
  %v1375 = vmax.f32 %v1371, 0.0
  %v1376 = vmax.f32 %v1372, 0.0
  %1377 = vst [vmem:[#allocation2 + $0x8] sm:$0xff] %v1373
  %1378 = vst [vmem:[#allocation2 + $0x10] sm:$0xff] %v1374
  %1379 = vst [vmem:[#allocation2 + $0x18] sm:$0xff] %v1375
  %1380 = vst [vmem:[#allocation2 + $0x20] sm:$0xff] %v1376
  %v1381 = vld [vmem:[#allocation2] sm:$0xff]
  %v1382 = vld [vmem:[#allocation2 + $0x8] sm:$0xff]
  %v1383 = vld [vmem:[#allocation2 + $0x10] sm:$0xff]
  %v1384 = vld [vmem:[#allocation2 + $0x18] sm:$0xff]
  %v1385 = vld [vmem:[#allocation2 + $0x20] sm:$0xff]
  %v1386 = vld [vmem:[#allocation2 + $0x30] sm:$0xff]
  %v1387 = vld [vmem:[#allocation2 + $0x38] sm:$0xff]
  %v1388 = vld [vmem:[#allocation2 + $0x40] sm:$0xff]
  %v1389 = vld [vmem:[#allocation2 + $0x48] sm:$0xff]
  %v1390 = vld [vmem:[#allocation2 + $0x50] sm:$0xff]
  %v1391 = vld [vmem:[%s1] ss:$8 sm:$0xf]
  %v1393 = vlaneseq
  %v1394 = vshrl.u32 %v1393, 7
  %v1395 = vsub.s32 0, %v1394
  %v1396 = vrot.slane %v1391, %v1395
  %v1397 = vlaneseq
  %v1398 = vshrl.u32 %v1397, 7
  %v1399 = vsub.s32 1, %v1398
  %v1400 = vrot.slane %v1391, %v1399
  %v1401 = vlaneseq
  %v1402 = vshrl.u32 %v1401, 7
  %v1403 = vsub.s32 2, %v1402
  %v1404 = vrot.slane %v1391, %v1403
  %v1405 = vlaneseq
  %v1406 = vshrl.u32 %v1405, 7
  %v1407 = vsub.s32 3, %v1406
  %v1408 = vrot.slane %v1391, %v1407
  %1409 = vrot.lane.b32.xlu0 %v1396, 111
  %v1410 = vpop.permute.xlu0 %1409
  %1411 = vrot.lane.b32.xlu0 %v1400, 111
  %v1412 = vpop.permute.xlu0 %1411
  %1413 = vrot.lane.b32.xlu0 %v1404, 111
  %v1414 = vpop.permute.xlu0 %1413
  %1415 = vrot.lane.b32.xlu0 %v1408, 111
  %v1416 = vpop.permute.xlu0 %1415
  %v1417 = vsel %vm86, %v1410, %v1412
  %v1418 = vsel %vm86, %v1412, %v1414
  %v1419 = vsel %vm86, %v1414, %v1416
  %v1425 = vmul.f32 %v1381, %v1410
  %v1426 = vmul.f32 %v1382, %v1417
  %v1427 = vmul.f32 %v1383, %v1418
  %v1428 = vmul.f32 %v1384, %v1419
  %v1429 = vmul.f32 %v1385, %v1416
  %v1430 = vmul.f32 %v1386, %v1410
  %v1431 = vmul.f32 %v1387, %v1417
  %v1432 = vmul.f32 %v1388, %v1418
  %v1433 = vmul.f32 %v1389, %v1419
  %v1434 = vmul.f32 %v1390, %v1416
  %v1435 = vpack.c.bf16 %v1430, %v1425
  %v1436 = vpack.c.bf16 %v1431, %v1426
  %v1437 = vpack.c.bf16 %v1432, %v1427
  %v1438 = vpack.c.bf16 %v1433, %v1428
  %v1439 = vpack.c.bf16 %v1434, %v1429
  %v1445 = vunpack.c.l.b16 %v1435
  %v1446 = vunpack.c.l.b16 %v1436
  %v1447 = vunpack.c.l.b16 %v1437
  %v1448 = vunpack.c.l.b16 %v1438
  %v1449 = vunpack.c.l.b16 %v1439
  %v1450 = vunpack.c.h.b16 %v1435
  %v1451 = vunpack.c.h.b16 %v1436
  %v1452 = vunpack.c.h.b16 %v1437
  %v1453 = vunpack.c.h.b16 %v1438
  %v1454 = vunpack.c.h.b16 %v1439
  %v1455 = vpack.c.b16 %v1446, %v1445
  %v1456 = vpack.c.b16 %v1448, %v1447
  %v1457 = vpack.c.b16 %v1449, %v1449
  %v1458 = vpack.c.b16 %v1451, %v1450
  %v1459 = vpack.c.b16 %v1453, %v1452
  %v1460 = vpack.c.b16 %v1454, %v1454
  %1461 = vrot.lane.b32.xlu0 %v1455, 17
  %v1462 = vpop.permute.xlu0 %1461
  %1463 = vrot.lane.b32.xlu0 %v1456, 17
  %v1464 = vpop.permute.xlu0 %1463
  %1465 = vrot.lane.b32.xlu0 %v1457, 17
  %v1466 = vpop.permute.xlu0 %1465
  %1467 = vrot.lane.b32.xlu0 %v1458, 17
  %v1468 = vpop.permute.xlu0 %1467
  %1469 = vrot.lane.b32.xlu0 %v1459, 17
  %v1470 = vpop.permute.xlu0 %1469
  %1471 = vrot.lane.b32.xlu0 %v1460, 17
  %v1472 = vpop.permute.xlu0 %1471
  %v1473 = vrot.slane %v1462, 4
  %v1474 = vrot.slane %v1464, 4
  %v1475 = vrot.slane %v1466, 4
  %v1476 = vrot.slane %v1468, 4
  %v1477 = vrot.slane %v1470, 4
  %v1478 = vrot.slane %v1472, 4
  %v1479 = vsel %vm149, %v1473, %v1474
  %v1480 = vsel %vm151, %v1462, %v1479
  %v1481 = vsel %vm149, %v1474, %v1475
  %v1482 = vsel %vm151, %v1464, %v1481
  %v1483 = vsel %vm149, %v1476, %v1477
  %v1484 = vsel %vm151, %v1468, %v1483
  %v1485 = vsel %vm149, %v1477, %v1478
  %v1486 = vsel %vm151, %v1470, %v1485
  %1491 = vst [vmem:[#allocation3] sm:$0xff] %v1480
  %1492 = vst [vmem:[#allocation3 + $0x8] sm:$0xff] %v1482
  %1493 = vst [vmem:[#allocation3 + $0x10] sm:$0xff] %v1484
  %1494 = vst [vmem:[#allocation3 + $0x18] sm:$0xff] %v1486
  %v1495 = vld [vmem:[#allocation2] sm:$0xff]
  %v1496 = vld [vmem:[#allocation2 + $0x8] sm:$0xff]
  %v1497 = vld [vmem:[#allocation2 + $0x10] sm:$0xff]
  %v1498 = vld [vmem:[#allocation2 + $0x18] sm:$0xff]
  %v1499 = vld [vmem:[#allocation2 + $0x20] sm:$0xff]
  %v1500 = vld [vmem:[#allocation2 + $0x30] sm:$0xff]
  %v1501 = vld [vmem:[#allocation2 + $0x38] sm:$0xff]
  %v1502 = vld [vmem:[#allocation2 + $0x40] sm:$0xff]
  %v1503 = vld [vmem:[#allocation2 + $0x48] sm:$0xff]
  %v1504 = vld [vmem:[#allocation2 + $0x50] sm:$0xff]
  %v1505 = vld [vmem:[%s177] ss:$8 sm:$0xf]
  %v1507 = vlaneseq
  %v1508 = vshrl.u32 %v1507, 7
  %v1509 = vsub.s32 0, %v1508
  %v1510 = vrot.slane %v1505, %v1509
  %v1511 = vlaneseq
  %v1512 = vshrl.u32 %v1511, 7
  %v1513 = vsub.s32 1, %v1512
  %v1514 = vrot.slane %v1505, %v1513
  %v1515 = vlaneseq
  %v1516 = vshrl.u32 %v1515, 7
  %v1517 = vsub.s32 2, %v1516
  %v1518 = vrot.slane %v1505, %v1517
  %v1519 = vlaneseq
  %v1520 = vshrl.u32 %v1519, 7
  %v1521 = vsub.s32 3, %v1520
  %v1522 = vrot.slane %v1505, %v1521
  %1523 = vrot.lane.b32.xlu0 %v1510, 112
  %v1524 = vpop.permute.xlu0 %1523
  %1525 = vrot.lane.b32.xlu0 %v1514, 112
  %v1526 = vpop.permute.xlu0 %1525
  %1527 = vrot.lane.b32.xlu0 %v1518, 112
  %v1528 = vpop.permute.xlu0 %1527
  %1529 = vrot.lane.b32.xlu0 %v1522, 112
  %v1530 = vpop.permute.xlu0 %1529
  %v1531 = vsel %vm204, %v1524, %v1526
  %v1532 = vsel %vm204, %v1526, %v1528
  %v1533 = vsel %vm204, %v1528, %v1530
  %v1539 = vmul.f32 %v1495, %v1524
  %v1540 = vmul.f32 %v1496, %v1531
  %v1541 = vmul.f32 %v1497, %v1532
  %v1542 = vmul.f32 %v1498, %v1533
  %v1543 = vmul.f32 %v1499, %v1530
  %v1544 = vmul.f32 %v1500, %v1524
  %v1545 = vmul.f32 %v1501, %v1531
  %v1546 = vmul.f32 %v1502, %v1532
  %v1547 = vmul.f32 %v1503, %v1533
  %v1548 = vmul.f32 %v1504, %v1530
  %v1549 = vpack.c.bf16 %v1544, %v1539
  %v1550 = vpack.c.bf16 %v1545, %v1540
  %v1551 = vpack.c.bf16 %v1546, %v1541
  %v1552 = vpack.c.bf16 %v1547, %v1542
  %v1553 = vpack.c.bf16 %v1548, %v1543
  %v1559 = vunpack.c.l.b16 %v1549
  %v1560 = vunpack.c.l.b16 %v1550
  %v1561 = vunpack.c.l.b16 %v1551
  %v1562 = vunpack.c.l.b16 %v1552
  %v1563 = vunpack.c.l.b16 %v1553
  %v1564 = vunpack.c.h.b16 %v1549
  %v1565 = vunpack.c.h.b16 %v1550
  %v1566 = vunpack.c.h.b16 %v1551
  %v1567 = vunpack.c.h.b16 %v1552
  %v1568 = vunpack.c.h.b16 %v1553
  %v1569 = vpack.c.b16 %v1560, %v1559
  %v1570 = vpack.c.b16 %v1562, %v1561
  %v1571 = vpack.c.b16 %v1563, %v1563
  %v1572 = vpack.c.b16 %v1565, %v1564
  %v1573 = vpack.c.b16 %v1567, %v1566
  %v1574 = vpack.c.b16 %v1568, %v1568
  %1575 = vrot.lane.b32.xlu0 %v1569, 16
  %v1576 = vpop.permute.xlu0 %1575
  %1577 = vrot.lane.b32.xlu0 %v1570, 16
  %v1578 = vpop.permute.xlu0 %1577
  %1579 = vrot.lane.b32.xlu0 %v1571, 16
  %v1580 = vpop.permute.xlu0 %1579
  %1581 = vrot.lane.b32.xlu0 %v1572, 16
  %v1582 = vpop.permute.xlu0 %1581
  %1583 = vrot.lane.b32.xlu0 %v1573, 16
  %v1584 = vpop.permute.xlu0 %1583
  %1585 = vrot.lane.b32.xlu0 %v1574, 16
  %v1586 = vpop.permute.xlu0 %1585
  %v1587 = vrot.slane %v1576, 4
  %v1588 = vrot.slane %v1578, 4
  %v1589 = vrot.slane %v1580, 4
  %v1590 = vrot.slane %v1582, 4
  %v1591 = vrot.slane %v1584, 4
  %v1592 = vrot.slane %v1586, 4
  %v1593 = vsel %vm149, %v1587, %v1588
  %v1594 = vsel %vm268, %v1576, %v1593
  %v1595 = vsel %vm149, %v1588, %v1589
  %v1596 = vsel %vm268, %v1578, %v1595
  %v1597 = vsel %vm149, %v1590, %v1591
  %v1598 = vsel %vm268, %v1582, %v1597
  %v1599 = vsel %vm149, %v1591, %v1592
  %v1600 = vsel %vm268, %v1584, %v1599
  %1605 = vst [vmem:[#allocation3 + $0x20] sm:$0xff] %v1594
  %1606 = vst [vmem:[#allocation3 + $0x28] sm:$0xff] %v1596
  %1607 = vst [vmem:[#allocation3 + $0x30] sm:$0xff] %v1598
  %1608 = vst [vmem:[#allocation3 + $0x38] sm:$0xff] %v1600
  %v1609 = vld [vmem:[#allocation2] sm:$0xff]
  %v1610 = vld [vmem:[#allocation2 + $0x8] sm:$0xff]
  %v1611 = vld [vmem:[#allocation2 + $0x10] sm:$0xff]
  %v1612 = vld [vmem:[#allocation2 + $0x18] sm:$0xff]
  %v1613 = vld [vmem:[#allocation2 + $0x20] sm:$0xff]
  %v1614 = vld [vmem:[#allocation2 + $0x30] sm:$0xff]
  %v1615 = vld [vmem:[#allocation2 + $0x38] sm:$0xff]
  %v1616 = vld [vmem:[#allocation2 + $0x40] sm:$0xff]
  %v1617 = vld [vmem:[#allocation2 + $0x48] sm:$0xff]
  %v1618 = vld [vmem:[#allocation2 + $0x50] sm:$0xff]
  %v1619 = vld [vmem:[%s294] ss:$8 sm:$0xf]
  %v1621 = vlaneseq
  %v1622 = vshrl.u32 %v1621, 7
  %v1623 = vsub.s32 0, %v1622
  %v1624 = vrot.slane %v1619, %v1623
  %v1625 = vlaneseq
  %v1626 = vshrl.u32 %v1625, 7
  %v1627 = vsub.s32 1, %v1626
  %v1628 = vrot.slane %v1619, %v1627
  %v1629 = vlaneseq
  %v1630 = vshrl.u32 %v1629, 7
  %v1631 = vsub.s32 2, %v1630
  %v1632 = vrot.slane %v1619, %v1631
  %v1633 = vlaneseq
  %v1634 = vshrl.u32 %v1633, 7
  %v1635 = vsub.s32 3, %v1634
  %v1636 = vrot.slane %v1619, %v1635
  %1637 = vrot.lane.b32.xlu0 %v1624, 113
  %v1638 = vpop.permute.xlu0 %1637
  %1639 = vrot.lane.b32.xlu0 %v1628, 113
  %v1640 = vpop.permute.xlu0 %1639
  %1641 = vrot.lane.b32.xlu0 %v1632, 113
  %v1642 = vpop.permute.xlu0 %1641
  %1643 = vrot.lane.b32.xlu0 %v1636, 113
  %v1644 = vpop.permute.xlu0 %1643
  %v1645 = vsel %vm321, %v1638, %v1640
  %v1646 = vsel %vm321, %v1640, %v1642
  %v1647 = vsel %vm321, %v1642, %v1644
  %v1653 = vmul.f32 %v1609, %v1638
  %v1654 = vmul.f32 %v1610, %v1645
  %v1655 = vmul.f32 %v1611, %v1646
  %v1656 = vmul.f32 %v1612, %v1647
  %v1657 = vmul.f32 %v1613, %v1644
  %v1658 = vmul.f32 %v1614, %v1638
  %v1659 = vmul.f32 %v1615, %v1645
  %v1660 = vmul.f32 %v1616, %v1646
  %v1661 = vmul.f32 %v1617, %v1647
  %v1662 = vmul.f32 %v1618, %v1644
  %v1663 = vpack.c.bf16 %v1658, %v1653
  %v1664 = vpack.c.bf16 %v1659, %v1654
  %v1665 = vpack.c.bf16 %v1660, %v1655
  %v1666 = vpack.c.bf16 %v1661, %v1656
  %v1667 = vpack.c.bf16 %v1662, %v1657
  %v1673 = vunpack.c.l.b16 %v1663
  %v1674 = vunpack.c.l.b16 %v1664
  %v1675 = vunpack.c.l.b16 %v1665
  %v1676 = vunpack.c.l.b16 %v1666
  %v1677 = vunpack.c.l.b16 %v1667
  %v1678 = vunpack.c.h.b16 %v1663
  %v1679 = vunpack.c.h.b16 %v1664
  %v1680 = vunpack.c.h.b16 %v1665
  %v1681 = vunpack.c.h.b16 %v1666
  %v1682 = vunpack.c.h.b16 %v1667
  %v1683 = vpack.c.b16 %v1674, %v1673
  %v1684 = vpack.c.b16 %v1676, %v1675
  %v1685 = vpack.c.b16 %v1677, %v1677
  %v1686 = vpack.c.b16 %v1679, %v1678
  %v1687 = vpack.c.b16 %v1681, %v1680
  %v1688 = vpack.c.b16 %v1682, %v1682
  %1689 = vrot.lane.b32.xlu0 %v1683, 15
  %v1690 = vpop.permute.xlu0 %1689
  %1691 = vrot.lane.b32.xlu0 %v1684, 15
  %v1692 = vpop.permute.xlu0 %1691
  %1693 = vrot.lane.b32.xlu0 %v1685, 15
  %v1694 = vpop.permute.xlu0 %1693
  %1695 = vrot.lane.b32.xlu0 %v1686, 15
  %v1696 = vpop.permute.xlu0 %1695
  %1697 = vrot.lane.b32.xlu0 %v1687, 15
  %v1698 = vpop.permute.xlu0 %1697
  %1699 = vrot.lane.b32.xlu0 %v1688, 15
  %v1700 = vpop.permute.xlu0 %1699
  %v1701 = vrot.slane %v1690, 4
  %v1702 = vrot.slane %v1692, 4
  %v1703 = vrot.slane %v1694, 4
  %v1704 = vrot.slane %v1696, 4
  %v1705 = vrot.slane %v1698, 4
  %v1706 = vrot.slane %v1700, 4
  %v1707 = vsel %vm149, %v1701, %v1702
  %v1708 = vsel %vm385, %v1690, %v1707
  %v1709 = vsel %vm149, %v1702, %v1703
  %v1710 = vsel %vm385, %v1692, %v1709
  %v1711 = vsel %vm149, %v1704, %v1705
  %v1712 = vsel %vm385, %v1696, %v1711
  %v1713 = vsel %vm149, %v1705, %v1706
  %v1714 = vsel %vm385, %v1698, %v1713
  %1719 = vst [vmem:[#allocation3 + $0x40] sm:$0xff] %v1708
  %1720 = vst [vmem:[#allocation3 + $0x48] sm:$0xff] %v1710
  %1721 = vst [vmem:[#allocation3 + $0x50] sm:$0xff] %v1712
  %1722 = vst [vmem:[#allocation3 + $0x58] sm:$0xff] %v1714
  %v1723 = vld [vmem:[#allocation2] sm:$0xff]
  %v1724 = vld [vmem:[#allocation2 + $0x8] sm:$0xff]
  %v1725 = vld [vmem:[#allocation2 + $0x10] sm:$0xff]
  %v1726 = vld [vmem:[#allocation2 + $0x18] sm:$0xff]
  %v1727 = vld [vmem:[#allocation2 + $0x20] sm:$0xff]
  %v1728 = vld [vmem:[#allocation2 + $0x30] sm:$0xff]
  %v1729 = vld [vmem:[#allocation2 + $0x38] sm:$0xff]
  %v1730 = vld [vmem:[#allocation2 + $0x40] sm:$0xff]
  %v1731 = vld [vmem:[#allocation2 + $0x48] sm:$0xff]
  %v1732 = vld [vmem:[#allocation2 + $0x50] sm:$0xff]
  %v1733 = vld [vmem:[%s411] ss:$8 sm:$0xf]
  %v1735 = vlaneseq
  %v1736 = vshrl.u32 %v1735, 7
  %v1737 = vsub.s32 0, %v1736
  %v1738 = vrot.slane %v1733, %v1737
  %v1739 = vlaneseq
  %v1740 = vshrl.u32 %v1739, 7
  %v1741 = vsub.s32 1, %v1740
  %v1742 = vrot.slane %v1733, %v1741
  %v1743 = vlaneseq
  %v1744 = vshrl.u32 %v1743, 7
  %v1745 = vsub.s32 2, %v1744
  %v1746 = vrot.slane %v1733, %v1745
  %v1747 = vlaneseq
  %v1748 = vshrl.u32 %v1747, 7
  %v1749 = vsub.s32 3, %v1748
  %v1750 = vrot.slane %v1733, %v1749
  %1751 = vrot.lane.b32.xlu0 %v1738, 127
  %v1752 = vpop.permute.xlu0 %1751
  %1753 = vrot.lane.b32.xlu0 %v1742, 127
  %v1754 = vpop.permute.xlu0 %1753
  %1755 = vrot.lane.b32.xlu0 %v1746, 127
  %v1756 = vpop.permute.xlu0 %1755
  %1757 = vrot.lane.b32.xlu0 %v1750, 127
  %v1758 = vpop.permute.xlu0 %1757
  %v1759 = vsel %vm438, %v1752, %v1754
  %v1760 = vsel %vm438, %v1754, %v1756
  %v1761 = vsel %vm438, %v1756, %v1758
  %v1767 = vmul.f32 %v1723, %v1752
  %v1768 = vmul.f32 %v1724, %v1759
  %v1769 = vmul.f32 %v1725, %v1760
  %v1770 = vmul.f32 %v1726, %v1761
  %v1771 = vmul.f32 %v1727, %v1758
  %v1772 = vmul.f32 %v1728, %v1752
  %v1773 = vmul.f32 %v1729, %v1759
  %v1774 = vmul.f32 %v1730, %v1760
  %v1775 = vmul.f32 %v1731, %v1761
  %v1776 = vmul.f32 %v1732, %v1758
  %v1777 = vpack.c.bf16 %v1772, %v1767
  %v1778 = vpack.c.bf16 %v1773, %v1768
  %v1779 = vpack.c.bf16 %v1774, %v1769
  %v1780 = vpack.c.bf16 %v1775, %v1770
  %v1781 = vpack.c.bf16 %v1776, %v1771
  %v1787 = vunpack.c.l.b16 %v1777
  %v1788 = vunpack.c.l.b16 %v1778
  %v1789 = vunpack.c.l.b16 %v1779
  %v1790 = vunpack.c.l.b16 %v1780
  %v1791 = vunpack.c.l.b16 %v1781
  %v1792 = vunpack.c.h.b16 %v1777
  %v1793 = vunpack.c.h.b16 %v1778
  %v1794 = vunpack.c.h.b16 %v1779
  %v1795 = vunpack.c.h.b16 %v1780
  %v1796 = vunpack.c.h.b16 %v1781
  %v1797 = vpack.c.b16 %v1788, %v1787
  %v1798 = vpack.c.b16 %v1790, %v1789
  %v1799 = vpack.c.b16 %v1791, %v1791
  %v1800 = vpack.c.b16 %v1793, %v1792
  %v1801 = vpack.c.b16 %v1795, %v1794
  %v1802 = vpack.c.b16 %v1796, %v1796
  %1803 = vrot.lane.b32.xlu0 %v1797, 1
  %v1804 = vpop.permute.xlu0 %1803
  %1805 = vrot.lane.b32.xlu0 %v1798, 1
  %v1806 = vpop.permute.xlu0 %1805
  %1807 = vrot.lane.b32.xlu0 %v1799, 1
  %v1808 = vpop.permute.xlu0 %1807
  %1809 = vrot.lane.b32.xlu0 %v1800, 1
  %v1810 = vpop.permute.xlu0 %1809
  %1811 = vrot.lane.b32.xlu0 %v1801, 1
  %v1812 = vpop.permute.xlu0 %1811
  %1813 = vrot.lane.b32.xlu0 %v1802, 1
  %v1814 = vpop.permute.xlu0 %1813
  %v1815 = vrot.slane %v1804, 4
  %v1816 = vrot.slane %v1806, 4
  %v1817 = vrot.slane %v1808, 4
  %v1818 = vrot.slane %v1810, 4
  %v1819 = vrot.slane %v1812, 4
  %v1820 = vrot.slane %v1814, 4
  %v1821 = vsel %vm149, %v1815, %v1816
  %v1822 = vsel %vm502, %v1804, %v1821
  %v1823 = vsel %vm149, %v1816, %v1817
  %v1824 = vsel %vm502, %v1806, %v1823
  %v1825 = vsel %vm149, %v1818, %v1819
  %v1826 = vsel %vm502, %v1810, %v1825
  %v1827 = vsel %vm149, %v1819, %v1820
  %v1828 = vsel %vm502, %v1812, %v1827
  %1833 = vst [vmem:[#allocation3 + $0x60] sm:$0xff] %v1822
  %1834 = vst [vmem:[#allocation3 + $0x68] sm:$0xff] %v1824
  %1835 = vst [vmem:[#allocation3 + $0x70] sm:$0xff] %v1826
  %1836 = vst [vmem:[#allocation3 + $0x78] sm:$0xff] %v1828
  %v1837 = vld [vmem:[#allocation2 + $0x8] sm:$0xff]
  %v1838 = vld [vmem:[#allocation2 + $0x10] sm:$0xff]
  %v1839 = vld [vmem:[#allocation2 + $0x18] sm:$0xff]
  %v1840 = vld [vmem:[#allocation2 + $0x20] sm:$0xff]
  %v1841 = vld [vmem:[#allocation2 + $0x38] sm:$0xff]
  %v1842 = vld [vmem:[#allocation2 + $0x40] sm:$0xff]
  %v1843 = vld [vmem:[#allocation2 + $0x48] sm:$0xff]
  %v1844 = vld [vmem:[#allocation2 + $0x50] sm:$0xff]
  %v1845 = vpack.c.bf16 %v1841, %v1837
  %v1846 = vpack.c.bf16 %v1842, %v1838
  %v1847 = vpack.c.bf16 %v1843, %v1839
  %v1848 = vpack.c.bf16 %v1844, %v1840
  %v1853 = vunpack.c.l.b16 %v1845
  %v1854 = vunpack.c.l.b16 %v1846
  %v1855 = vunpack.c.l.b16 %v1847
  %v1856 = vunpack.c.l.b16 %v1848
  %v1857 = vunpack.c.h.b16 %v1845
  %v1858 = vunpack.c.h.b16 %v1846
  %v1859 = vunpack.c.h.b16 %v1847
  %v1860 = vunpack.c.h.b16 %v1848
  %v1861 = vpack.c.b16 %v1854, %v1853
  %v1862 = vpack.c.b16 %v1856, %v1855
  %v1863 = vpack.c.b16 %v1858, %v1857
  %v1864 = vpack.c.b16 %v1860, %v1859
  %1869 = vst [vmem:[#allocation3 + $0x80] sm:$0xff] %v1861
  %1870 = vst [vmem:[#allocation3 + $0x88] sm:$0xff] %v1862
  %1871 = vst [vmem:[#allocation3 + $0x90] sm:$0xff] %v1863
  %1872 = vst [vmem:[#allocation3 + $0x98] sm:$0xff] %v1864
  %v1873 = vld [vmem:[#allocation2 + $0x8] sm:$0xff]
  %v1874 = vld [vmem:[#allocation2 + $0x10] sm:$0xff]
  %v1875 = vld [vmem:[#allocation2 + $0x18] sm:$0xff]
  %v1876 = vld [vmem:[#allocation2 + $0x20] sm:$0xff]
  %v1877 = vld [vmem:[#allocation2 + $0x28] sm:$0xff]
  %v1878 = vld [vmem:[#allocation2 + $0x38] sm:$0xff]
  %v1879 = vld [vmem:[#allocation2 + $0x40] sm:$0xff]
  %v1880 = vld [vmem:[#allocation2 + $0x48] sm:$0xff]
  %v1881 = vld [vmem:[#allocation2 + $0x50] sm:$0xff]
  %v1882 = vld [vmem:[#allocation2 + $0x58] sm:$0xff]
  %v1883 = vld [vmem:[%s564] ss:$8 sm:$0xf]
  %v1885 = vlaneseq
  %v1886 = vshrl.u32 %v1885, 7
  %v1887 = vsub.s32 0, %v1886
  %v1888 = vrot.slane %v1883, %v1887
  %v1889 = vlaneseq
  %v1890 = vshrl.u32 %v1889, 7
  %v1891 = vsub.s32 1, %v1890
  %v1892 = vrot.slane %v1883, %v1891
  %v1893 = vlaneseq
  %v1894 = vshrl.u32 %v1893, 7
  %v1895 = vsub.s32 2, %v1894
  %v1896 = vrot.slane %v1883, %v1895
  %v1897 = vlaneseq
  %v1898 = vshrl.u32 %v1897, 7
  %v1899 = vsub.s32 3, %v1898
  %v1900 = vrot.slane %v1883, %v1899
  %1901 = vrot.lane.b32.xlu0 %v1888, 1
  %v1902 = vpop.permute.xlu0 %1901
  %1903 = vrot.lane.b32.xlu0 %v1892, 1
  %v1904 = vpop.permute.xlu0 %1903
  %1905 = vrot.lane.b32.xlu0 %v1896, 1
  %v1906 = vpop.permute.xlu0 %1905
  %1907 = vrot.lane.b32.xlu0 %v1900, 1
  %v1908 = vpop.permute.xlu0 %1907
  %v1909 = vsel %vm591, %v1902, %v1904
  %v1910 = vsel %vm591, %v1904, %v1906
  %v1911 = vsel %vm591, %v1906, %v1908
  %v1917 = vmul.f32 %v1873, %v1902
  %v1918 = vmul.f32 %v1874, %v1909
  %v1919 = vmul.f32 %v1875, %v1910
  %v1920 = vmul.f32 %v1876, %v1911
  %v1921 = vmul.f32 %v1877, %v1908
  %v1922 = vmul.f32 %v1878, %v1902
  %v1923 = vmul.f32 %v1879, %v1909
  %v1924 = vmul.f32 %v1880, %v1910
  %v1925 = vmul.f32 %v1881, %v1911
  %v1926 = vmul.f32 %v1882, %v1908
  %v1927 = vpack.c.bf16 %v1922, %v1917
  %v1928 = vpack.c.bf16 %v1923, %v1918
  %v1929 = vpack.c.bf16 %v1924, %v1919
  %v1930 = vpack.c.bf16 %v1925, %v1920
  %v1931 = vpack.c.bf16 %v1926, %v1921
  %v1937 = vunpack.c.l.b16 %v1927
  %v1938 = vunpack.c.l.b16 %v1928
  %v1939 = vunpack.c.l.b16 %v1929
  %v1940 = vunpack.c.l.b16 %v1930
  %v1941 = vunpack.c.l.b16 %v1931
  %v1942 = vunpack.c.h.b16 %v1927
  %v1943 = vunpack.c.h.b16 %v1928
  %v1944 = vunpack.c.h.b16 %v1929
  %v1945 = vunpack.c.h.b16 %v1930
  %v1946 = vunpack.c.h.b16 %v1931
  %v1947 = vpack.c.b16 %v1938, %v1937
  %v1948 = vpack.c.b16 %v1940, %v1939
  %v1949 = vpack.c.b16 %v1941, %v1941
  %v1950 = vpack.c.b16 %v1943, %v1942
  %v1951 = vpack.c.b16 %v1945, %v1944
  %v1952 = vpack.c.b16 %v1946, %v1946
  %1953 = vrot.lane.b32.xlu0 %v1947, 127
  %v1954 = vpop.permute.xlu0 %1953
  %1955 = vrot.lane.b32.xlu0 %v1948, 127
  %v1956 = vpop.permute.xlu0 %1955
  %1957 = vrot.lane.b32.xlu0 %v1949, 127
  %v1958 = vpop.permute.xlu0 %1957
  %1959 = vrot.lane.b32.xlu0 %v1950, 127
  %v1960 = vpop.permute.xlu0 %1959
  %1961 = vrot.lane.b32.xlu0 %v1951, 127
  %v1962 = vpop.permute.xlu0 %1961
  %1963 = vrot.lane.b32.xlu0 %v1952, 127
  %v1964 = vpop.permute.xlu0 %1963
  %v1965 = vrot.slane %v1954, 4
  %v1966 = vrot.slane %v1956, 4
  %v1967 = vrot.slane %v1958, 4
  %v1968 = vrot.slane %v1960, 4
  %v1969 = vrot.slane %v1962, 4
  %v1970 = vrot.slane %v1964, 4
  %v1971 = vsel %vm149, %v1965, %v1966
  %v1972 = vsel %vm655, %v1954, %v1971
  %v1973 = vsel %vm149, %v1966, %v1967
  %v1974 = vsel %vm655, %v1956, %v1973
  %v1975 = vsel %vm149, %v1968, %v1969
  %v1976 = vsel %vm655, %v1960, %v1975
  %v1977 = vsel %vm149, %v1969, %v1970
  %v1978 = vsel %vm655, %v1962, %v1977
  %1983 = vst [vmem:[#allocation3 + $0xa0] sm:$0xff] %v1972
  %1984 = vst [vmem:[#allocation3 + $0xa8] sm:$0xff] %v1974
  %1985 = vst [vmem:[#allocation3 + $0xb0] sm:$0xff] %v1976
  %1986 = vst [vmem:[#allocation3 + $0xb8] sm:$0xff] %v1978
  %v1987 = vld [vmem:[#allocation2 + $0x8] sm:$0xff]
  %v1988 = vld [vmem:[#allocation2 + $0x10] sm:$0xff]
  %v1989 = vld [vmem:[#allocation2 + $0x18] sm:$0xff]
  %v1990 = vld [vmem:[#allocation2 + $0x20] sm:$0xff]
  %v1991 = vld [vmem:[#allocation2 + $0x28] sm:$0xff]
  %v1992 = vld [vmem:[#allocation2 + $0x38] sm:$0xff]
  %v1993 = vld [vmem:[#allocation2 + $0x40] sm:$0xff]
  %v1994 = vld [vmem:[#allocation2 + $0x48] sm:$0xff]
  %v1995 = vld [vmem:[#allocation2 + $0x50] sm:$0xff]
  %v1996 = vld [vmem:[#allocation2 + $0x58] sm:$0xff]
  %v1997 = vld [vmem:[%s681] ss:$8 sm:$0xf]
  %v1999 = vlaneseq
  %v2000 = vshrl.u32 %v1999, 7
  %v2001 = vsub.s32 0, %v2000
  %v2002 = vrot.slane %v1997, %v2001
  %v2003 = vlaneseq
  %v2004 = vshrl.u32 %v2003, 7
  %v2005 = vsub.s32 1, %v2004
  %v2006 = vrot.slane %v1997, %v2005
  %v2007 = vlaneseq
  %v2008 = vshrl.u32 %v2007, 7
  %v2009 = vsub.s32 2, %v2008
  %v2010 = vrot.slane %v1997, %v2009
  %v2011 = vlaneseq
  %v2012 = vshrl.u32 %v2011, 7
  %v2013 = vsub.s32 3, %v2012
  %v2014 = vrot.slane %v1997, %v2013
  %2015 = vrot.lane.b32.xlu0 %v2002, 15
  %v2016 = vpop.permute.xlu0 %2015
  %2017 = vrot.lane.b32.xlu0 %v2006, 15
  %v2018 = vpop.permute.xlu0 %2017
  %2019 = vrot.lane.b32.xlu0 %v2010, 15
  %v2020 = vpop.permute.xlu0 %2019
  %2021 = vrot.lane.b32.xlu0 %v2014, 15
  %v2022 = vpop.permute.xlu0 %2021
  %v2023 = vsel %vm708, %v2016, %v2018
  %v2024 = vsel %vm708, %v2018, %v2020
  %v2025 = vsel %vm708, %v2020, %v2022
  %v2031 = vmul.f32 %v1987, %v2016
  %v2032 = vmul.f32 %v1988, %v2023
  %v2033 = vmul.f32 %v1989, %v2024
  %v2034 = vmul.f32 %v1990, %v2025
  %v2035 = vmul.f32 %v1991, %v2022
  %v2036 = vmul.f32 %v1992, %v2016
  %v2037 = vmul.f32 %v1993, %v2023
  %v2038 = vmul.f32 %v1994, %v2024
  %v2039 = vmul.f32 %v1995, %v2025
  %v2040 = vmul.f32 %v1996, %v2022
  %v2041 = vpack.c.bf16 %v2036, %v2031
  %v2042 = vpack.c.bf16 %v2037, %v2032
  %v2043 = vpack.c.bf16 %v2038, %v2033
  %v2044 = vpack.c.bf16 %v2039, %v2034
  %v2045 = vpack.c.bf16 %v2040, %v2035
  %v2051 = vunpack.c.l.b16 %v2041
  %v2052 = vunpack.c.l.b16 %v2042
  %v2053 = vunpack.c.l.b16 %v2043
  %v2054 = vunpack.c.l.b16 %v2044
  %v2055 = vunpack.c.l.b16 %v2045
  %v2056 = vunpack.c.h.b16 %v2041
  %v2057 = vunpack.c.h.b16 %v2042
  %v2058 = vunpack.c.h.b16 %v2043
  %v2059 = vunpack.c.h.b16 %v2044
  %v2060 = vunpack.c.h.b16 %v2045
  %v2061 = vpack.c.b16 %v2052, %v2051
  %v2062 = vpack.c.b16 %v2054, %v2053
  %v2063 = vpack.c.b16 %v2055, %v2055
  %v2064 = vpack.c.b16 %v2057, %v2056
  %v2065 = vpack.c.b16 %v2059, %v2058
  %v2066 = vpack.c.b16 %v2060, %v2060
  %2067 = vrot.lane.b32.xlu0 %v2061, 113
  %v2068 = vpop.permute.xlu0 %2067
  %2069 = vrot.lane.b32.xlu0 %v2062, 113
  %v2070 = vpop.permute.xlu0 %2069
  %2071 = vrot.lane.b32.xlu0 %v2063, 113
  %v2072 = vpop.permute.xlu0 %2071
  %2073 = vrot.lane.b32.xlu0 %v2064, 113
  %v2074 = vpop.permute.xlu0 %2073
  %2075 = vrot.lane.b32.xlu0 %v2065, 113
  %v2076 = vpop.permute.xlu0 %2075
  %2077 = vrot.lane.b32.xlu0 %v2066, 113
  %v2078 = vpop.permute.xlu0 %2077
  %v2079 = vrot.slane %v2068, 4
  %v2080 = vrot.slane %v2070, 4
  %v2081 = vrot.slane %v2072, 4
  %v2082 = vrot.slane %v2074, 4
  %v2083 = vrot.slane %v2076, 4
  %v2084 = vrot.slane %v2078, 4
  %v2085 = vsel %vm149, %v2079, %v2080
  %v2086 = vsel %vm772, %v2068, %v2085
  %v2087 = vsel %vm149, %v2080, %v2081
  %v2088 = vsel %vm772, %v2070, %v2087
  %v2089 = vsel %vm149, %v2082, %v2083
  %v2090 = vsel %vm772, %v2074, %v2089
  %v2091 = vsel %vm149, %v2083, %v2084
  %v2092 = vsel %vm772, %v2076, %v2091
  %2097 = vst [vmem:[#allocation3 + $0xc0] sm:$0xff] %v2086
  %2098 = vst [vmem:[#allocation3 + $0xc8] sm:$0xff] %v2088
  %2099 = vst [vmem:[#allocation3 + $0xd0] sm:$0xff] %v2090
  %2100 = vst [vmem:[#allocation3 + $0xd8] sm:$0xff] %v2092
  %v2101 = vld [vmem:[#allocation2 + $0x8] sm:$0xff]
  %v2102 = vld [vmem:[#allocation2 + $0x10] sm:$0xff]
  %v2103 = vld [vmem:[#allocation2 + $0x18] sm:$0xff]
  %v2104 = vld [vmem:[#allocation2 + $0x20] sm:$0xff]
  %v2105 = vld [vmem:[#allocation2 + $0x28] sm:$0xff]
  %v2106 = vld [vmem:[#allocation2 + $0x38] sm:$0xff]
  %v2107 = vld [vmem:[#allocation2 + $0x40] sm:$0xff]
  %v2108 = vld [vmem:[#allocation2 + $0x48] sm:$0xff]
  %v2109 = vld [vmem:[#allocation2 + $0x50] sm:$0xff]
  %v2110 = vld [vmem:[#allocation2 + $0x58] sm:$0xff]
  %v2111 = vld [vmem:[%s798] ss:$8 sm:$0xf]
  %v2113 = vlaneseq
  %v2114 = vshrl.u32 %v2113, 7
  %v2115 = vsub.s32 0, %v2114
  %v2116 = vrot.slane %v2111, %v2115
  %v2117 = vlaneseq
  %v2118 = vshrl.u32 %v2117, 7
  %v2119 = vsub.s32 1, %v2118
  %v2120 = vrot.slane %v2111, %v2119
  %v2121 = vlaneseq
  %v2122 = vshrl.u32 %v2121, 7
  %v2123 = vsub.s32 2, %v2122
  %v2124 = vrot.slane %v2111, %v2123
  %v2125 = vlaneseq
  %v2126 = vshrl.u32 %v2125, 7
  %v2127 = vsub.s32 3, %v2126
  %v2128 = vrot.slane %v2111, %v2127
  %2129 = vrot.lane.b32.xlu0 %v2116, 16
  %v2130 = vpop.permute.xlu0 %2129
  %2131 = vrot.lane.b32.xlu0 %v2120, 16
  %v2132 = vpop.permute.xlu0 %2131
  %2133 = vrot.lane.b32.xlu0 %v2124, 16
  %v2134 = vpop.permute.xlu0 %2133
  %2135 = vrot.lane.b32.xlu0 %v2128, 16
  %v2136 = vpop.permute.xlu0 %2135
  %v2137 = vsel %vm825, %v2130, %v2132
  %v2138 = vsel %vm825, %v2132, %v2134
  %v2139 = vsel %vm825, %v2134, %v2136
  %v2145 = vmul.f32 %v2101, %v2130
  %v2146 = vmul.f32 %v2102, %v2137
  %v2147 = vmul.f32 %v2103, %v2138
  %v2148 = vmul.f32 %v2104, %v2139
  %v2149 = vmul.f32 %v2105, %v2136
  %v2150 = vmul.f32 %v2106, %v2130
  %v2151 = vmul.f32 %v2107, %v2137
  %v2152 = vmul.f32 %v2108, %v2138
  %v2153 = vmul.f32 %v2109, %v2139
  %v2154 = vmul.f32 %v2110, %v2136
  %v2155 = vpack.c.bf16 %v2150, %v2145
  %v2156 = vpack.c.bf16 %v2151, %v2146
  %v2157 = vpack.c.bf16 %v2152, %v2147
  %v2158 = vpack.c.bf16 %v2153, %v2148
  %v2159 = vpack.c.bf16 %v2154, %v2149
  %v2165 = vunpack.c.l.b16 %v2155
  %v2166 = vunpack.c.l.b16 %v2156
  %v2167 = vunpack.c.l.b16 %v2157
  %v2168 = vunpack.c.l.b16 %v2158
  %v2169 = vunpack.c.l.b16 %v2159
  %v2170 = vunpack.c.h.b16 %v2155
  %v2171 = vunpack.c.h.b16 %v2156
  %v2172 = vunpack.c.h.b16 %v2157
  %v2173 = vunpack.c.h.b16 %v2158
  %v2174 = vunpack.c.h.b16 %v2159
  %v2175 = vpack.c.b16 %v2166, %v2165
  %v2176 = vpack.c.b16 %v2168, %v2167
  %v2177 = vpack.c.b16 %v2169, %v2169
  %v2178 = vpack.c.b16 %v2171, %v2170
  %v2179 = vpack.c.b16 %v2173, %v2172
  %v2180 = vpack.c.b16 %v2174, %v2174
  %2181 = vrot.lane.b32.xlu0 %v2175, 112
  %v2182 = vpop.permute.xlu0 %2181
  %2183 = vrot.lane.b32.xlu0 %v2176, 112
  %v2184 = vpop.permute.xlu0 %2183
  %2185 = vrot.lane.b32.xlu0 %v2177, 112
  %v2186 = vpop.permute.xlu0 %2185
  %2187 = vrot.lane.b32.xlu0 %v2178, 112
  %v2188 = vpop.permute.xlu0 %2187
  %2189 = vrot.lane.b32.xlu0 %v2179, 112
  %v2190 = vpop.permute.xlu0 %2189
  %2191 = vrot.lane.b32.xlu0 %v2180, 112
  %v2192 = vpop.permute.xlu0 %2191
  %v2193 = vrot.slane %v2182, 4
  %v2194 = vrot.slane %v2184, 4
  %v2195 = vrot.slane %v2186, 4
  %v2196 = vrot.slane %v2188, 4
  %v2197 = vrot.slane %v2190, 4
  %v2198 = vrot.slane %v2192, 4
  %v2199 = vsel %vm149, %v2193, %v2194
  %v2200 = vsel %vm889, %v2182, %v2199
  %v2201 = vsel %vm149, %v2194, %v2195
  %v2202 = vsel %vm889, %v2184, %v2201
  %v2203 = vsel %vm149, %v2196, %v2197
  %v2204 = vsel %vm889, %v2188, %v2203
  %v2205 = vsel %vm149, %v2197, %v2198
  %v2206 = vsel %vm889, %v2190, %v2205
  %2211 = vst [vmem:[#allocation3 + $0xe0] sm:$0xff] %v2200
  %2212 = vst [vmem:[#allocation3 + $0xe8] sm:$0xff] %v2202
  %2213 = vst [vmem:[#allocation3 + $0xf0] sm:$0xff] %v2204
  %2214 = vst [vmem:[#allocation3 + $0xf8] sm:$0xff] %v2206
  %v2215 = vld [vmem:[#allocation2 + $0x8] sm:$0xff]
  %v2216 = vld [vmem:[#allocation2 + $0x10] sm:$0xff]
  %v2217 = vld [vmem:[#allocation2 + $0x18] sm:$0xff]
  %v2218 = vld [vmem:[#allocation2 + $0x20] sm:$0xff]
  %v2219 = vld [vmem:[#allocation2 + $0x28] sm:$0xff]
  %v2220 = vld [vmem:[#allocation2 + $0x38] sm:$0xff]
  %v2221 = vld [vmem:[#allocation2 + $0x40] sm:$0xff]
  %v2222 = vld [vmem:[#allocation2 + $0x48] sm:$0xff]
  %v2223 = vld [vmem:[#allocation2 + $0x50] sm:$0xff]
  %v2224 = vld [vmem:[#allocation2 + $0x58] sm:$0xff]
  %v2225 = vld [vmem:[%s915] ss:$8 sm:$0xf]
  %v2227 = vlaneseq
  %v2228 = vshrl.u32 %v2227, 7
  %v2229 = vsub.s32 0, %v2228
  %v2230 = vrot.slane %v2225, %v2229
  %v2231 = vlaneseq
  %v2232 = vshrl.u32 %v2231, 7
  %v2233 = vsub.s32 1, %v2232
  %v2234 = vrot.slane %v2225, %v2233
  %v2235 = vlaneseq
  %v2236 = vshrl.u32 %v2235, 7
  %v2237 = vsub.s32 2, %v2236
  %v2238 = vrot.slane %v2225, %v2237
  %v2239 = vlaneseq
  %v2240 = vshrl.u32 %v2239, 7
  %v2241 = vsub.s32 3, %v2240
  %v2242 = vrot.slane %v2225, %v2241
  %2243 = vrot.lane.b32.xlu0 %v2230, 17
  %v2244 = vpop.permute.xlu0 %2243
  %2245 = vrot.lane.b32.xlu0 %v2234, 17
  %v2246 = vpop.permute.xlu0 %2245
  %2247 = vrot.lane.b32.xlu0 %v2238, 17
  %v2248 = vpop.permute.xlu0 %2247
  %2249 = vrot.lane.b32.xlu0 %v2242, 17
  %v2250 = vpop.permute.xlu0 %2249
  %v2251 = vsel %vm942, %v2244, %v2246
  %v2252 = vsel %vm942, %v2246, %v2248
  %v2253 = vsel %vm942, %v2248, %v2250
  %v2259 = vmul.f32 %v2215, %v2244
  %v2260 = vmul.f32 %v2216, %v2251
  %v2261 = vmul.f32 %v2217, %v2252
  %v2262 = vmul.f32 %v2218, %v2253
  %v2263 = vmul.f32 %v2219, %v2250
  %v2264 = vmul.f32 %v2220, %v2244
  %v2265 = vmul.f32 %v2221, %v2251
  %v2266 = vmul.f32 %v2222, %v2252
  %v2267 = vmul.f32 %v2223, %v2253
  %v2268 = vmul.f32 %v2224, %v2250
  %v2269 = vpack.c.bf16 %v2264, %v2259
  %v2270 = vpack.c.bf16 %v2265, %v2260
  %v2271 = vpack.c.bf16 %v2266, %v2261
  %v2272 = vpack.c.bf16 %v2267, %v2262
  %v2273 = vpack.c.bf16 %v2268, %v2263
  %v2279 = vunpack.c.l.b16 %v2269
  %v2280 = vunpack.c.l.b16 %v2270
  %v2281 = vunpack.c.l.b16 %v2271
  %v2282 = vunpack.c.l.b16 %v2272
  %v2283 = vunpack.c.l.b16 %v2273
  %v2284 = vunpack.c.h.b16 %v2269
  %v2285 = vunpack.c.h.b16 %v2270
  %v2286 = vunpack.c.h.b16 %v2271
  %v2287 = vunpack.c.h.b16 %v2272
  %v2288 = vunpack.c.h.b16 %v2273
  %v2289 = vpack.c.b16 %v2280, %v2279
  %v2290 = vpack.c.b16 %v2282, %v2281
  %v2291 = vpack.c.b16 %v2283, %v2283
  %v2292 = vpack.c.b16 %v2285, %v2284
  %v2293 = vpack.c.b16 %v2287, %v2286
  %v2294 = vpack.c.b16 %v2288, %v2288
  %2295 = vrot.lane.b32.xlu0 %v2289, 111
  %v2296 = vpop.permute.xlu0 %2295
  %2297 = vrot.lane.b32.xlu0 %v2290, 111
  %v2298 = vpop.permute.xlu0 %2297
  %2299 = vrot.lane.b32.xlu0 %v2291, 111
  %v2300 = vpop.permute.xlu0 %2299
  %2301 = vrot.lane.b32.xlu0 %v2292, 111
  %v2302 = vpop.permute.xlu0 %2301
  %2303 = vrot.lane.b32.xlu0 %v2293, 111
  %v2304 = vpop.permute.xlu0 %2303
  %2305 = vrot.lane.b32.xlu0 %v2294, 111
  %v2306 = vpop.permute.xlu0 %2305
  %v2307 = vrot.slane %v2296, 4
  %v2308 = vrot.slane %v2298, 4
  %v2309 = vrot.slane %v2300, 4
  %v2310 = vrot.slane %v2302, 4
  %v2311 = vrot.slane %v2304, 4
  %v2312 = vrot.slane %v2306, 4
  %v2313 = vsel %vm149, %v2307, %v2308
  %v2314 = vsel %vm1006, %v2296, %v2313
  %v2315 = vsel %vm149, %v2308, %v2309
  %v2316 = vsel %vm1006, %v2298, %v2315
  %v2317 = vsel %vm149, %v2310, %v2311
  %v2318 = vsel %vm1006, %v2302, %v2317
  %v2319 = vsel %vm149, %v2311, %v2312
  %v2320 = vsel %vm1006, %v2304, %v2319
  %2325 = vst [vmem:[#allocation3 + $0x100] sm:$0xff] %v2314
  %2326 = vst [vmem:[#allocation3 + $0x108] sm:$0xff] %v2316
  %2327 = vst [vmem:[#allocation3 + $0x110] sm:$0xff] %v2318
  %2328 = vst [vmem:[#allocation3 + $0x118] sm:$0xff] %v2320
  %v2329 = vld [vmem:[%s5] sm:$0xff]
  %v2330 = vld [vmem:[#allocation3] sm:$0xff]
  %v2331 = vld [vmem:[#allocation3 + $0x8] sm:$0xff]
  %v2332 = vld [vmem:[#allocation3 + $0x10] sm:$0xff]
  %v2333 = vld [vmem:[#allocation3 + $0x18] sm:$0xff]
  %v2334 = vld [vmem:[#allocation3 + $0x20] sm:$0xff]
  %v2335 = vld [vmem:[#allocation3 + $0x28] sm:$0xff]
  %v2336 = vld [vmem:[#allocation3 + $0x30] sm:$0xff]
  %v2337 = vld [vmem:[#allocation3 + $0x38] sm:$0xff]
  %v2338 = vld [vmem:[#allocation3 + $0x40] sm:$0xff]
  %v2339 = vld [vmem:[#allocation3 + $0x48] sm:$0xff]
  %v2340 = vld [vmem:[#allocation3 + $0x50] sm:$0xff]
  %v2341 = vld [vmem:[#allocation3 + $0x58] sm:$0xff]
  %v2342 = vld [vmem:[#allocation3 + $0x60] sm:$0xff]
  %v2343 = vld [vmem:[#allocation3 + $0x68] sm:$0xff]
  %v2344 = vld [vmem:[#allocation3 + $0x70] sm:$0xff]
  %v2345 = vld [vmem:[#allocation3 + $0x78] sm:$0xff]
  %v2346 = vld [vmem:[#allocation3 + $0x80] sm:$0xff]
  %v2347 = vld [vmem:[#allocation3 + $0x88] sm:$0xff]
  %v2348 = vld [vmem:[#allocation3 + $0x90] sm:$0xff]
  %v2349 = vld [vmem:[#allocation3 + $0x98] sm:$0xff]
  %v2350 = vld [vmem:[#allocation3 + $0xa0] sm:$0xff]
  %v2351 = vld [vmem:[#allocation3 + $0xa8] sm:$0xff]
  %v2352 = vld [vmem:[#allocation3 + $0xb0] sm:$0xff]
  %v2353 = vld [vmem:[#allocation3 + $0xb8] sm:$0xff]
  %v2354 = vld [vmem:[#allocation3 + $0xc0] sm:$0xff]
  %v2355 = vld [vmem:[#allocation3 + $0xc8] sm:$0xff]
  %v2356 = vld [vmem:[#allocation3 + $0xd0] sm:$0xff]
  %v2357 = vld [vmem:[#allocation3 + $0xd8] sm:$0xff]
  %v2358 = vld [vmem:[#allocation3 + $0xe0] sm:$0xff]
  %v2359 = vld [vmem:[#allocation3 + $0xe8] sm:$0xff]
  %v2360 = vld [vmem:[#allocation3 + $0xf0] sm:$0xff]
  %v2361 = vld [vmem:[#allocation3 + $0xf8] sm:$0xff]
  %v2362 = vld [vmem:[#allocation3 + $0x100] sm:$0xff]
  %v2363 = vld [vmem:[#allocation3 + $0x108] sm:$0xff]
  %v2364 = vld [vmem:[#allocation3 + $0x110] sm:$0xff]
  %v2365 = vld [vmem:[#allocation3 + $0x118] sm:$0xff]
  %v2367 = vunpack.c.l.b16 %v2329
  %v2368 = vunpack.c.h.b16 %v2329
  %v2369 = vpack.c.b16 %v2367, %v2367
  %v2370 = vpack.c.b16 %v2368, %v2368
  %v2408 = vunpack.c.l.b16 %v2330
  %v2409 = vunpack.c.h.b16 %v2330
  %v2410 = vunpack.c.l.b16 %v2331
  %v2411 = vunpack.c.h.b16 %v2331
  %v2412 = vunpack.c.l.b16 %v2332
  %v2413 = vunpack.c.h.b16 %v2332
  %v2414 = vunpack.c.l.b16 %v2333
  %v2415 = vunpack.c.h.b16 %v2333
  %v2416 = vunpack.c.l.b16 %v2334
  %v2417 = vunpack.c.h.b16 %v2334
  %v2418 = vunpack.c.l.b16 %v2335
  %v2419 = vunpack.c.h.b16 %v2335
  %v2420 = vunpack.c.l.b16 %v2336
  %v2421 = vunpack.c.h.b16 %v2336
  %v2422 = vunpack.c.l.b16 %v2337
  %v2423 = vunpack.c.h.b16 %v2337
  %v2424 = vunpack.c.l.b16 %v2338
  %v2425 = vunpack.c.h.b16 %v2338
  %v2426 = vunpack.c.l.b16 %v2339
  %v2427 = vunpack.c.h.b16 %v2339
  %v2428 = vunpack.c.l.b16 %v2340
  %v2429 = vunpack.c.h.b16 %v2340
  %v2430 = vunpack.c.l.b16 %v2341
  %v2431 = vunpack.c.h.b16 %v2341
  %v2432 = vunpack.c.l.b16 %v2342
  %v2433 = vunpack.c.h.b16 %v2342
  %v2434 = vunpack.c.l.b16 %v2343
  %v2435 = vunpack.c.h.b16 %v2343
  %v2436 = vunpack.c.l.b16 %v2344
  %v2437 = vunpack.c.h.b16 %v2344
  %v2438 = vunpack.c.l.b16 %v2345
  %v2439 = vunpack.c.h.b16 %v2345
  %v2440 = vunpack.c.l.b16 %v2346
  %v2441 = vunpack.c.h.b16 %v2346
  %v2442 = vunpack.c.l.b16 %v2347
  %v2443 = vunpack.c.h.b16 %v2347
  %v2444 = vunpack.c.l.b16 %v2348
  %v2445 = vunpack.c.h.b16 %v2348
  %v2446 = vunpack.c.l.b16 %v2349
  %v2447 = vunpack.c.h.b16 %v2349
  %v2448 = vunpack.c.l.b16 %v2350
  %v2449 = vunpack.c.h.b16 %v2350
  %v2450 = vunpack.c.l.b16 %v2351
  %v2451 = vunpack.c.h.b16 %v2351
  %v2452 = vunpack.c.l.b16 %v2352
  %v2453 = vunpack.c.h.b16 %v2352
  %v2454 = vunpack.c.l.b16 %v2353
  %v2455 = vunpack.c.h.b16 %v2353
  %v2456 = vunpack.c.l.b16 %v2354
  %v2457 = vunpack.c.h.b16 %v2354
  %v2458 = vunpack.c.l.b16 %v2355
  %v2459 = vunpack.c.h.b16 %v2355
  %v2460 = vunpack.c.l.b16 %v2356
  %v2461 = vunpack.c.h.b16 %v2356
  %v2462 = vunpack.c.l.b16 %v2357
  %v2463 = vunpack.c.h.b16 %v2357
  %v2464 = vunpack.c.l.b16 %v2358
  %v2465 = vunpack.c.h.b16 %v2358
  %v2466 = vunpack.c.l.b16 %v2359
  %v2467 = vunpack.c.h.b16 %v2359
  %v2468 = vunpack.c.l.b16 %v2360
  %v2469 = vunpack.c.h.b16 %v2360
  %v2470 = vunpack.c.l.b16 %v2361
  %v2471 = vunpack.c.h.b16 %v2361
  %v2472 = vunpack.c.l.b16 %v2362
  %v2473 = vunpack.c.h.b16 %v2362
  %v2474 = vunpack.c.l.b16 %v2363
  %v2475 = vunpack.c.h.b16 %v2363
  %v2476 = vunpack.c.l.b16 %v2364
  %v2477 = vunpack.c.h.b16 %v2364
  %v2478 = vunpack.c.l.b16 %v2365
  %v2479 = vunpack.c.h.b16 %v2365
  %v2480 = vpack.c.b16 %v2412, %v2408
  %v2481 = vpack.c.b16 %v2413, %v2409
  %v2482 = vpack.c.b16 %v2414, %v2410
  %v2483 = vpack.c.b16 %v2415, %v2411
  %v2484 = vpack.c.b16 %v2420, %v2416
  %v2485 = vpack.c.b16 %v2421, %v2417
  %v2486 = vpack.c.b16 %v2422, %v2418
  %v2487 = vpack.c.b16 %v2423, %v2419
  %v2488 = vpack.c.b16 %v2428, %v2424
  %v2489 = vpack.c.b16 %v2429, %v2425
  %v2490 = vpack.c.b16 %v2430, %v2426
  %v2491 = vpack.c.b16 %v2431, %v2427
  %v2492 = vpack.c.b16 %v2436, %v2432
  %v2493 = vpack.c.b16 %v2437, %v2433
  %v2494 = vpack.c.b16 %v2438, %v2434
  %v2495 = vpack.c.b16 %v2439, %v2435
  %v2496 = vpack.c.b16 %v2444, %v2440
  %v2497 = vpack.c.b16 %v2445, %v2441
  %v2498 = vpack.c.b16 %v2446, %v2442
  %v2499 = vpack.c.b16 %v2447, %v2443
  %v2500 = vpack.c.b16 %v2452, %v2448
  %v2501 = vpack.c.b16 %v2453, %v2449
  %v2502 = vpack.c.b16 %v2454, %v2450
  %v2503 = vpack.c.b16 %v2455, %v2451
  %v2504 = vpack.c.b16 %v2460, %v2456
  %v2505 = vpack.c.b16 %v2461, %v2457
  %v2506 = vpack.c.b16 %v2462, %v2458
  %v2507 = vpack.c.b16 %v2463, %v2459
  %v2508 = vpack.c.b16 %v2468, %v2464
  %v2509 = vpack.c.b16 %v2469, %v2465
  %v2510 = vpack.c.b16 %v2470, %v2466
  %v2511 = vpack.c.b16 %v2471, %v2467
  %v2512 = vpack.c.b16 %v2476, %v2472
  %v2513 = vpack.c.b16 %v2477, %v2473
  %v2514 = vpack.c.b16 %v2478, %v2474
  %v2515 = vpack.c.b16 %v2479, %v2475
  %v2553 = vsel %vm825, %v2370, 0
  %2555 = vmatprep.subr.bf16.mxu0 %v2509
  %2556 = vmatpush1.bf16.msra.mxu0 %v2508
  %2557 = vmatprep.subr.bf16.mxu0 %v2505
  %2558 = vmatpush1.bf16.msra.mxu0 %v2504
  %2559 = vmatprep.subr.bf16.mxu0 %v2501
  %2560 = vmatpush1.bf16.msra.mxu0 %v2500
  %2561 = vmatprep.subr.bf16.mxu0 %v2497
  %2562 = vmatpush1.bf16.msra.mxu0 %v2496
  %2563 = vmatprep.subr.bf16.mxu0 %v2493
  %2564 = vmatpush1.bf16.msra.mxu0 %v2492
  %2565 = vmatprep.subr.bf16.mxu0 %v2489
  %2566 = vmatpush1.bf16.msra.mxu0 %v2488
  %2567 = vmatprep.subr.bf16.mxu0 %v2485
  %2568 = vmatpush1.bf16.msra.mxu0 %v2484
  %2569 = vmatprep.subr.bf16.mxu0 %v2481
  %2570 = vmatpush1.bf16.msra.mxu0 %v2480
  %2571 = vmatprep.subr.bf16.mxu0 0
  %2572 = vmatpush2.bf16.msra.mxu0 0
  %2573 = vmatprep.subr.bf16.mxu0 0
  %2574 = vmatpush2.bf16.msra.mxu0 0
  %2575 = vmatprep.subr.bf16.mxu0 0
  %2576 = vmatpush2.bf16.msra.mxu0 0
  %2577 = vmatprep.subr.bf16.mxu0 0
  %2578 = vmatpush2.bf16.msra.mxu0 0
  %2579 = vmatprep.subr.bf16.mxu0 0
  %2580 = vmatpush2.bf16.msra.mxu0 0
  %2581 = vmatprep.subr.bf16.mxu0 0
  %2582 = vmatpush2.bf16.msra.mxu0 0
  %2583 = vmatprep.subr.bf16.mxu0 0
  %2584 = vmatpush2.bf16.msra.mxu0 0
  %2585 = vmatprep.subr.bf16.mxu0 %v2513
  %2586 = vmatpush2.bf16.msra.mxu0 %v2512
  %2587 = vmatprep.mubr.bf16.mxu0 %v2553
  %2588 = vmatmul.mubr.bf16.gmra.mxu0 %v2369
  %v2589 = vpop.f32.mrf.mxu0
  %v2590 = vadd.f32 0.0, %v2589
  %v2591 = vpop.f32.mrf.mxu0
  %v2592 = vadd.f32 0.0, %v2591
  %v2593 = vpop.f32.mrf.mxu0
  %v2594 = vpop.f32.mrf.mxu0
  %2595 = vdwg.mxu0
  %2596 = vmatprep.subr.bf16.mxu0 %v2511
  %2597 = vmatpush1.bf16.msra.mxu0 %v2510
  %2598 = vmatprep.subr.bf16.mxu0 %v2507
  %2599 = vmatpush1.bf16.msra.mxu0 %v2506
  %2600 = vmatprep.subr.bf16.mxu0 %v2503
  %2601 = vmatpush1.bf16.msra.mxu0 %v2502
  %2602 = vmatprep.subr.bf16.mxu0 %v2499
  %2603 = vmatpush1.bf16.msra.mxu0 %v2498
  %2604 = vmatprep.subr.bf16.mxu0 %v2495
  %2605 = vmatpush1.bf16.msra.mxu0 %v2494
  %2606 = vmatprep.subr.bf16.mxu0 %v2491
  %2607 = vmatpush1.bf16.msra.mxu0 %v2490
  %2608 = vmatprep.subr.bf16.mxu0 %v2487
  %2609 = vmatpush1.bf16.msra.mxu0 %v2486
  %2610 = vmatprep.subr.bf16.mxu0 %v2483
  %2611 = vmatpush1.bf16.msra.mxu0 %v2482
  %2612 = vmatprep.subr.bf16.mxu0 0
  %2613 = vmatpush2.bf16.msra.mxu0 0
  %2614 = vmatprep.subr.bf16.mxu0 0
  %2615 = vmatpush2.bf16.msra.mxu0 0
  %2616 = vmatprep.subr.bf16.mxu0 0
  %2617 = vmatpush2.bf16.msra.mxu0 0
  %2618 = vmatprep.subr.bf16.mxu0 0
  %2619 = vmatpush2.bf16.msra.mxu0 0
  %2620 = vmatprep.subr.bf16.mxu0 0
  %2621 = vmatpush2.bf16.msra.mxu0 0
  %2622 = vmatprep.subr.bf16.mxu0 0
  %2623 = vmatpush2.bf16.msra.mxu0 0
  %2624 = vmatprep.subr.bf16.mxu0 0
  %2625 = vmatpush2.bf16.msra.mxu0 0
  %2626 = vmatprep.subr.bf16.mxu0 %v2515
  %2627 = vmatpush2.bf16.msra.mxu0 %v2514
  %2628 = vmatprep.mubr.bf16.mxu0 %v2553
  %2629 = vmatmul.mubr.bf16.gmra.mxu0 %v2369
  %v2630 = vpop.f32.mrf.mxu0
  %v2631 = vadd.f32 0.0, %v2630
  %v2632 = vpop.f32.mrf.mxu0
  %v2633 = vadd.f32 0.0, %v2632
  %v2634 = vpop.f32.mrf.mxu0
  %v2635 = vpop.f32.mrf.mxu0
  %2636 = vdwg.mxu0
  %v2637 = vadd.f32 %v2590, %v2592
  %v2638 = vadd.f32 %v2637, %v2631
  %v2639 = vadd.f32 %v2638, %v2633
  %2640 = vadd.xlane.f32.xlu0 %v2639
  %v2641 = vpop.xlane.xlu0 %2640
  %v2642 = vmul.f32 %v2590, %v2590
  %v2643 = vmul.f32 %v2592, %v2592
  %v2644 = vmul.f32 %v2631, %v2631
  %v2645 = vmul.f32 %v2633, %v2633
  %v2646 = vadd.f32 %v2642, %v2643
  %v2647 = vadd.f32 %v2646, %v2644
  %v2648 = vadd.f32 %v2647, %v2645
  %2649 = vadd.xlane.f32.xlu0 %v2648
  %v2650 = vpop.xlane.xlu0 %2649
  %v2651 = vmul.f32 %v2641, 0.001953125
  %v2652 = vmul.f32 %v2650, 0.001953125
  %v2653 = vmul.f32 %v2651, %v2651
  %v2654 = vsub.f32 %v2652, %v2653
  %v2655 = vld [vmem:[%s6] sm:$0xff]
  %v2656 = vadd.f32 %v2654, 1e-05
  %v2657 = vrsqrt.pop %v2656
  %v2658 = vmul.f32 %v2655, %v2657
  %v2659 = vld [vmem:[%s7] sm:$0xff]
  %v2660 = vmul.f32 %v2651, %v2658
  %v2661 = vsub.f32 %v2659, %v2660
  %2663 = vset.pattern.permute.xlu0 0
  %2664 = vperm.xlu0 %2663, %v2658
  %v2665 = vpop.permute.xlu0 %2664
  %v2667 = vmul.f32 %v2590, %v2665
  %v2668 = vmul.f32 %v2592, %v2665
  %v2669 = vmul.f32 %v2631, %v2665
  %v2670 = vmul.f32 %v2633, %v2665
  %2672 = vset.pattern.permute.xlu0 0
  %2673 = vperm.xlu0 %2672, %v2661
  %v2674 = vpop.permute.xlu0 %2673
  %v2676 = vadd.f32 %v2667, %v2674
  %v2677 = vadd.f32 %v2668, %v2674
  %v2678 = vadd.f32 %v2669, %v2674
  %v2679 = vadd.f32 %v2670, %v2674
  %v2680 = vmax.f32 %v2676, 0.0
  %v2681 = vmax.f32 %v2677, 0.0
  %v2682 = vmax.f32 %v2678, 0.0
  %v2683 = vmax.f32 %v2679, 0.0
  %2684 = vst [vmem:[%s8] sm:$0xff] %v2680
  %2685 = vst [vmem:[%s8 + $0x8] sm:$0xff] %v2681
  %2686 = vst [vmem:[%s8 + $0x10] sm:$0xff] %v2682
  %2687 = vst [vmem:[%s8 + $0x18] sm:$0xff] %v2683
  // Predicated region
  $region34: #{unet_conv2_forward.1} parent=0 // pred_check
    _
  $region35: #{unet_conv2_forward.1} parent=0 // pred_check_branch
    %2689 = sbr.rel (0) target = $region37
  $region36: #{unet_conv2_forward.1} parent=0 // pred_region
    _
  $region37: #{unet_conv2_forward.1} parent=0 // pred_fallthru
    _
  // Predicated region
  $region38: #{unet_conv2_forward.1} parent=0 // pred_check
    _
  $region39: #{unet_conv2_forward.1} parent=0 // pred_check_branch
    %2691 = sbr.rel (0) target = $region41
  $region40: #{unet_conv2_forward.1} parent=0 // pred_region
    _
  $region41: #{unet_conv2_forward.1} parent=0 // pred_fallthru
    _

</llo_original>
